<compile_context>
chip_gen: v5e
topology: v5e:2x2
jax: 0.10.0
libtpu: 0.0.40
codegen_flags: <defaults>
</compile_context>

<pallas_src>
import jax
import jax.numpy as jnp
from jax import lax
from jax.experimental import pallas as pl
from jax.experimental.pallas import tpu as pltpu

C = 64           # in/out channels fixed by the module
EPS = 1e-5       # nn.InstanceNorm2d default eps
NEG_SLOPE = 0.1  # LeakyReLU slope


def _zero_border(ref):
    """Zero only the 1-pixel spatial border of a (Bt, H+2, W+2, C) VMEM slab."""
    Bt, Hp, Wp, Cc = ref.shape
    zrow = jnp.zeros((Bt, 1, Wp, Cc), ref.dtype)
    ref[:, 0:1, :, :] = zrow
    ref[:, Hp - 1:Hp, :, :] = zrow
    zcol = jnp.zeros((Bt, Hp, 1, Cc), ref.dtype)
    ref[:, :, 0:1, :] = zcol
    ref[:, :, Wp - 1:Wp, :] = zcol


def _conv3x3_packed(slab_ref, w_ref, Bt, H, W):
    """3x3 'same' conv as 3 bf16 MXU matmuls with K packed over (dw, cin) = 192.

    slab_ref: (Bt, H+2, W+2, C) f32 zero-padded activation slab (VMEM scratch)
    w_ref   : (3, 3*C, C) bf16 packed weights, row index = dw*C + cin (per kernel row dh)
    returns : (Bt*H*W, C) float32 accumulator
    """
    M = Bt * H * W
    acc = jnp.zeros((M, C), jnp.float32)
    for dh in range(3):
        taps = [slab_ref[:, dh:dh + H, dw:dw + W, :].reshape(M, C) for dw in range(3)]
        patch = jnp.concatenate(taps, axis=-1).astype(jnp.bfloat16)      # (M, 3C) bf16
        acc = acc + jnp.dot(patch, w_ref[dh], preferred_element_type=jnp.float32)
    return acc


def _res_block_kernel(x_ref, w1_ref, w2_ref, gamma_ref, beta_ref, o_ref, pad_ref):
    # x_ref   : (Bt, H, W, C) f32 unpadded input block (also the residual)
    # w*_ref  : (3, 3*C, C) bf16 packed conv weights
    # gamma/beta_ref : (1, C) f32 InstanceNorm affine params (shared by both norms)
    # o_ref   : (Bt, H, W, C) f32
    # pad_ref : (Bt, H+2, W+2, C) f32 VMEM scratch, reused for both conv inputs
    Bt, H, W, _ = o_ref.shape
    HW = H * W

    gamma = gamma_ref[...].reshape(1, 1, C)
    beta = beta_ref[...].reshape(1, 1, C)

    def instance_norm(acc):                       # acc: (Bt*HW, C) f32, per-image stats over HW
        a = acc.reshape(Bt, HW, C)
        mean = jnp.mean(a, axis=1, keepdims=True)
        centered = a - mean                       # computed once, reused for var + normalize
        var = jnp.mean(centered * centered, axis=1, keepdims=True)   # biased var (PyTorch IN)
        return centered * lax.rsqrt(var + EPS) * gamma + beta        # (Bt, HW, C)

    x_in = x_ref[...]                             # (Bt, H, W, C) f32 (residual kept as a value)

    # Build the zero-padded input slab in VMEM (border zeroed once, interior overwritten).
    _zero_border(pad_ref)
    pad_ref[:, 1:1 + H, 1:1 + W, :] = x_in

    # ---- conv1 -> InstanceNorm -> LeakyReLU(0.1) ----
    acc1 = _conv3x3_packed(pad_ref, w1_ref, Bt, H, W)
    y1 = instance_norm(acc1)
    y1 = jnp.where(y1 > 0, y1, NEG_SLOPE * y1)

    # Reuse the same padded slab for conv2's input (border still zero).
    pad_ref[:, 1:1 + H, 1:1 + W, :] = y1.reshape(Bt, H, W, C)

    # ---- conv2 -> same InstanceNorm (shared gamma/beta) -> + residual ----
    acc2 = _conv3x3_packed(pad_ref, w2_ref, Bt, H, W)
    y2 = instance_norm(acc2)

    o_ref[...] = (y2.reshape(Bt, H, W, C) + x_in).astype(o_ref.dtype)


def _pick_batch_block(N, H, W):
    """Fold batch elements into one block for small images (amortize per-step overhead, fill the
    MXU M dim), under a rough per-step VMEM budget, while keeping >=2 grid steps when N >= 2 so a
    2-TensorCore chip can split the parallel axis."""
    lane_c = 128  # C=64 pads to 128 lanes in VMEM
    per_img = (
        (H + 2) * (W + 2) * lane_c * 4            # single f32 padded slab
        + 2 * 2 * H * W * lane_c * 4              # double-buffered in/out f32 blocks
        + 8 * H * W * lane_c * 4                  # patches / acc / norm temporaries (generous)
    )
    budget = 20 << 20
    bt = 1
    for d in range(1, N + 1):
        if N % d:
            continue
        if d * per_img > budget:
            continue
        if N >= 2 and N // d < 2:
            continue
        bt = d
    return bt


def residual_block(x_nchw, w1, w2, gamma, beta, *, batch_block=None):
    """x_nchw: (N, 64, H, W); w1/w2: (64, 64, 3, 3) PyTorch OIHW; gamma/beta: (64,)."""
    N, Cin, H, W = x_nchw.shape
    assert Cin == C

    x = jnp.transpose(x_nchw, (0, 2, 3, 1)).astype(jnp.float32)               # NHWC (no pad)
    # OIHW -> HWIO -> packed (3, dw*C + cin, cout), bf16 (native MXU dtype).
    w1p = jnp.transpose(w1, (2, 3, 1, 0)).reshape(3, 3 * C, C).astype(jnp.bfloat16)
    w2p = jnp.transpose(w2, (2, 3, 1, 0)).reshape(3, 3 * C, C).astype(jnp.bfloat16)
    gamma2 = gamma.reshape(1, C).astype(jnp.float32)
    beta2 = beta.reshape(1, C).astype(jnp.float32)

    Bt = batch_block if batch_block is not None else _pick_batch_block(N, H, W)
    assert N % Bt == 0

    out_nhwc = pl.pallas_call(
        _res_block_kernel,
        out_shape=jax.ShapeDtypeStruct((N, H, W, C), jnp.float32),
        grid_spec=pltpu.PrefetchScalarGridSpec(
            num_scalar_prefetch=0,
            grid=(N // Bt,),
            in_specs=[
                pl.BlockSpec((Bt, H, W, C), lambda n: (n, 0, 0, 0)),
                pl.BlockSpec((3, 3 * C, C), lambda n: (0, 0, 0)),
                pl.BlockSpec((3, 3 * C, C), lambda n: (0, 0, 0)),
                pl.BlockSpec((1, C), lambda n: (0, 0)),
                pl.BlockSpec((1, C), lambda n: (0, 0)),
            ],
            out_specs=pl.BlockSpec((Bt, H, W, C), lambda n: (n, 0, 0, 0)),
            scratch_shapes=[
                pltpu.VMEM((Bt, H + 2, W + 2, C), jnp.float32),   # shared padded slab
            ],
        ),
        compiler_params=pltpu.CompilerParams(
            dimension_semantics=("parallel",),
            vmem_limit_bytes=48 * 1024 * 1024,
        ),
    )(x, w1p, w2p, gamma2, beta2)

    return jnp.transpose(out_nhwc, (0, 3, 1, 2))                              # back to NCHW


def residual_block_ref(x_nchw, w1, w2, gamma, beta):
    """Pure-JAX f32 reference (same math as the PyTorch module) for correctness checking."""
    x = jnp.transpose(x_nchw, (0, 2, 3, 1)).astype(jnp.float32)
    w1h = jnp.transpose(w1, (2, 3, 1, 0)).astype(jnp.float32)
    w2h = jnp.transpose(w2, (2, 3, 1, 0)).astype(jnp.float32)
    dn = ('NHWC', 'HWIO', 'NHWC')

    def conv(a, w):
        return lax.conv_general_dilated(a, w, (1, 1), ((1, 1), (1, 1)),
                                        dimension_numbers=dn)

    def inorm(a):
        mean = jnp.mean(a, axis=(1, 2), keepdims=True)
        var = jnp.mean((a - mean) ** 2, axis=(1, 2), keepdims=True)
        return (a - mean) / jnp.sqrt(var + EPS) * gamma + beta

    y = conv(x, w1h)
    y = inorm(y)
    y = jnp.where(y > 0, y, NEG_SLOPE * y)
    y = conv(y, w2h)
    y = inorm(y)
    y = y + x
    return jnp.transpose(y, (0, 3, 1, 2))


if __name__ == "__main__":
    key = jax.random.PRNGKey(0)
    k1, k2, k3, k4, k5 = jax.random.split(key, 5)

    N, H, W = 2, 8, 8
    # Deterministic synthetic parameters (module __init__ fixes channels=64, 3x3, no conv bias).
    x = jax.random.normal(k1, (N, C, H, W), dtype=jnp.float32)
    w1 = jax.random.normal(k2, (C, C, 3, 3), dtype=jnp.float32) * 0.05   # conv1.weight (OIHW)
    w2 = jax.random.normal(k3, (C, C, 3, 3), dtype=jnp.float32) * 0.05   # conv2.weight (OIHW)
    gamma = 1.0 + 0.1 * jax.random.normal(k4, (C,), dtype=jnp.float32)   # in1.weight
    beta = 0.1 * jax.random.normal(k5, (C,), dtype=jnp.float32)          # in1.bias

    out = jax.block_until_ready(residual_block(x, w1, w2, gamma, beta))
    ref = jax.block_until_ready(residual_block_ref(x, w1, w2, gamma, beta))

    assert out.shape == (N, C, H, W)
    # bf16 MXU operands -> small deviation vs the f32 reference.
    if not jnp.allclose(out, ref, atol=3e-2, rtol=3e-2):
        max_err = float(jnp.max(jnp.abs(out - ref)))
        raise AssertionError(
            f"Pallas kernel output mismatch vs JAX reference (max abs err {max_err:.4g})")
    print("KERNEL_OK")
</pallas_src>

<mosaic_0001>
module attributes {stable_mosaic.version = 11 : i64} {
  func.func @_res_block_kernel(%arg0: i32, %arg1: memref<1x8x8x64xf32, #tpu.memory_space<vmem>>, %arg2: memref<3x192x64xbf16, #tpu.memory_space<vmem>>, %arg3: memref<3x192x64xbf16, #tpu.memory_space<vmem>>, %arg4: memref<1x64xf32, #tpu.memory_space<vmem>>, %arg5: memref<1x64xf32, #tpu.memory_space<vmem>>, %arg6: memref<1x8x8x64xf32, #tpu.memory_space<vmem>>, %arg7: memref<1x10x10x64xf32, #tpu.memory_space<vmem>>) attributes {dimension_semantics = [#tpu.dimension_semantics<parallel>], iteration_bounds = array<i64: 2>, scalar_prefetch = 0 : i64, scratch_operands = 1 : i64, tpu.core_type = #tpu.core_type<tc>, window_params = [{transform_indices = @transform_0, window_bounds = array<i64: 1, 8, 8, 64>}, {pipeline_mode = #tpu.pipeline_mode<synchronous>, transform_indices = @transform_1, window_bounds = array<i64: 3, 192, 64>}, {pipeline_mode = #tpu.pipeline_mode<synchronous>, transform_indices = @transform_2, window_bounds = array<i64: 3, 192, 64>}, {pipeline_mode = #tpu.pipeline_mode<synchronous>, transform_indices = @transform_3, window_bounds = array<i64: 1, 64>}, {pipeline_mode = #tpu.pipeline_mode<synchronous>, transform_indices = @transform_4, window_bounds = array<i64: 1, 64>}, {transform_indices = @transform_5, window_bounds = array<i64: 1, 8, 8, 64>}]} {
    %c0 = arith.constant 0 : index
    %c0_0 = arith.constant 0 : index
    %0 = vector.load %arg4[%c0, %c0_0] : memref<1x64xf32, #tpu.memory_space<vmem>>, vector<1x64xf32>
    %1 = vector.shape_cast %0 : vector<1x64xf32> to vector<1x1x64xf32>
    %c0_1 = arith.constant 0 : index
    %c0_2 = arith.constant 0 : index
    %2 = vector.load %arg5[%c0_1, %c0_2] : memref<1x64xf32, #tpu.memory_space<vmem>>, vector<1x64xf32>
    %3 = vector.shape_cast %2 : vector<1x64xf32> to vector<1x1x64xf32>
    %c0_3 = arith.constant 0 : index
    %c0_4 = arith.constant 0 : index
    %c0_5 = arith.constant 0 : index
    %c0_6 = arith.constant 0 : index
    %4 = vector.load %arg1[%c0_3, %c0_4, %c0_5, %c0_6] : memref<1x8x8x64xf32, #tpu.memory_space<vmem>>, vector<1x8x8x64xf32>
    %cst = arith.constant 0.000000e+00 : f32
    %5 = vector.broadcast %cst : f32 to vector<1x1x10x64xf32>
    %c0_7 = arith.constant 0 : index
    %c0_8 = arith.constant 0 : index
    %c0_9 = arith.constant 0 : index
    %c0_10 = arith.constant 0 : index
    %6 = vector.load %arg7[%c0_7, %c0_8, %c0_9, %c0_10] : memref<1x10x10x64xf32, #tpu.memory_space<vmem>>, vector<1x1x10x64xf32>
    tpu.vector_store %arg7[%c0_7, %c0_8, %c0_9, %c0_10], %5 {strides = array<i32>} : memref<1x10x10x64xf32, #tpu.memory_space<vmem>>, vector<1x1x10x64xf32>,
    %c0_11 = arith.constant 0 : index
    %c9 = arith.constant 9 : index
    %c0_12 = arith.constant 0 : index
    %c0_13 = arith.constant 0 : index
    %7 = vector.load %arg7[%c0_11, %c9, %c0_12, %c0_13] : memref<1x10x10x64xf32, #tpu.memory_space<vmem>>, vector<1x1x10x64xf32>
    tpu.vector_store %arg7[%c0_11, %c9, %c0_12, %c0_13], %5 {strides = array<i32>} : memref<1x10x10x64xf32, #tpu.memory_space<vmem>>, vector<1x1x10x64xf32>,
    %cst_14 = arith.constant 0.000000e+00 : f32
    %8 = vector.broadcast %cst_14 : f32 to vector<1x10x1x64xf32>
    %c0_15 = arith.constant 0 : index
    %c0_16 = arith.constant 0 : index
    %c0_17 = arith.constant 0 : index
    %c0_18 = arith.constant 0 : index
    %9 = vector.load %arg7[%c0_15, %c0_16, %c0_17, %c0_18] : memref<1x10x10x64xf32, #tpu.memory_space<vmem>>, vector<1x10x1x64xf32>
    tpu.vector_store %arg7[%c0_15, %c0_16, %c0_17, %c0_18], %8 {strides = array<i32>} : memref<1x10x10x64xf32, #tpu.memory_space<vmem>>, vector<1x10x1x64xf32>,
    %c0_19 = arith.constant 0 : index
    %c0_20 = arith.constant 0 : index
    %c9_21 = arith.constant 9 : index
    %c0_22 = arith.constant 0 : index
    %10 = vector.load %arg7[%c0_19, %c0_20, %c9_21, %c0_22] : memref<1x10x10x64xf32, #tpu.memory_space<vmem>>, vector<1x10x1x64xf32>
    tpu.vector_store %arg7[%c0_19, %c0_20, %c9_21, %c0_22], %8 {strides = array<i32>} : memref<1x10x10x64xf32, #tpu.memory_space<vmem>>, vector<1x10x1x64xf32>,
    %c0_23 = arith.constant 0 : index
    %c1 = arith.constant 1 : index
    %c1_24 = arith.constant 1 : index
    %c0_25 = arith.constant 0 : index
    %11 = vector.load %arg7[%c0_23, %c1, %c1_24, %c0_25] : memref<1x10x10x64xf32, #tpu.memory_space<vmem>>, vector<1x8x8x64xf32>
    tpu.vector_store %arg7[%c0_23, %c1, %c1_24, %c0_25], %4 {strides = array<i32>} : memref<1x10x10x64xf32, #tpu.memory_space<vmem>>, vector<1x8x8x64xf32>,
    %cst_26 = arith.constant 0.000000e+00 : f32
    %12 = vector.broadcast %cst_26 : f32 to vector<64x64xf32>
    %c0_27 = arith.constant 0 : index
    %c0_28 = arith.constant 0 : index
    %c0_29 = arith.constant 0 : index
    %c0_30 = arith.constant 0 : index
    %13 = vector.load %arg7[%c0_27, %c0_28, %c0_29, %c0_30] : memref<1x10x10x64xf32, #tpu.memory_space<vmem>>, vector<1x8x8x64xf32>
    %14 = vector.shape_cast %13 : vector<1x8x8x64xf32> to vector<64x64xf32>
    %c0_31 = arith.constant 0 : index
    %c0_32 = arith.constant 0 : index
    %c1_33 = arith.constant 1 : index
    %c0_34 = arith.constant 0 : index
    %15 = vector.load %arg7[%c0_31, %c0_32, %c1_33, %c0_34] : memref<1x10x10x64xf32, #tpu.memory_space<vmem>>, vector<1x8x8x64xf32>
    %16 = vector.shape_cast %15 : vector<1x8x8x64xf32> to vector<64x64xf32>
    %c0_35 = arith.constant 0 : index
    %c0_36 = arith.constant 0 : index
    %c2 = arith.constant 2 : index
    %c0_37 = arith.constant 0 : index
    %17 = vector.load %arg7[%c0_35, %c0_36, %c2, %c0_37] : memref<1x10x10x64xf32, #tpu.memory_space<vmem>>, vector<1x8x8x64xf32>
    %18 = vector.shape_cast %17 : vector<1x8x8x64xf32> to vector<64x64xf32>
    %19 = tpu.concatenate %14, %16, %18 in 1 : vector<64x64xf32>, vector<64x64xf32>, vector<64x64xf32> -> vector<64x192xf32>
    %20 = arith.truncf %19 : vector<64x192xf32> to vector<64x192xbf16>
    %c0_38 = arith.constant 0 : index
    %c0_39 = arith.constant 0 : index
    %c0_40 = arith.constant 0 : index
    %21 = vector.load %arg2[%c0_38, %c0_39, %c0_40] : memref<3x192x64xbf16, #tpu.memory_space<vmem>>, vector<1x192x64xbf16>
    %22 = vector.shape_cast %21 : vector<1x192x64xbf16> to vector<192x64xbf16>
    %cst_41 = arith.constant dense<0.000000e+00> : vector<64x64xf32>
    %23 = tpu.matmul %20, %22, %cst_41 {dimension_numbers = #tpu.dot_dimension_numbers<[1], [0], [0], [1], [0, 0, 1, 1], [], []>} : vector<64x192xbf16>, vector<192x64xbf16>, vector<64x64xf32> -> vector<64x64xf32>
    %24 = arith.addf %12, %23 : vector<64x64xf32>
    %c0_42 = arith.constant 0 : index
    %c1_43 = arith.constant 1 : index
    %c0_44 = arith.constant 0 : index
    %c0_45 = arith.constant 0 : index
    %25 = vector.load %arg7[%c0_42, %c1_43, %c0_44, %c0_45] : memref<1x10x10x64xf32, #tpu.memory_space<vmem>>, vector<1x8x8x64xf32>
    %26 = vector.shape_cast %25 : vector<1x8x8x64xf32> to vector<64x64xf32>
    %c0_46 = arith.constant 0 : index
    %c1_47 = arith.constant 1 : index
    %c1_48 = arith.constant 1 : index
    %c0_49 = arith.constant 0 : index
    %27 = vector.load %arg7[%c0_46, %c1_47, %c1_48, %c0_49] : memref<1x10x10x64xf32, #tpu.memory_space<vmem>>, vector<1x8x8x64xf32>
    %28 = vector.shape_cast %27 : vector<1x8x8x64xf32> to vector<64x64xf32>
    %c0_50 = arith.constant 0 : index
    %c1_51 = arith.constant 1 : index
    %c2_52 = arith.constant 2 : index
    %c0_53 = arith.constant 0 : index
    %29 = vector.load %arg7[%c0_50, %c1_51, %c2_52, %c0_53] : memref<1x10x10x64xf32, #tpu.memory_space<vmem>>, vector<1x8x8x64xf32>
    %30 = vector.shape_cast %29 : vector<1x8x8x64xf32> to vector<64x64xf32>
    %31 = tpu.concatenate %26, %28, %30 in 1 : vector<64x64xf32>, vector<64x64xf32>, vector<64x64xf32> -> vector<64x192xf32>
    %32 = arith.truncf %31 : vector<64x192xf32> to vector<64x192xbf16>
    %c1_54 = arith.constant 1 : index
    %c0_55 = arith.constant 0 : index
    %c0_56 = arith.constant 0 : index
    %33 = vector.load %arg2[%c1_54, %c0_55, %c0_56] : memref<3x192x64xbf16, #tpu.memory_space<vmem>>, vector<1x192x64xbf16>
    %34 = vector.shape_cast %33 : vector<1x192x64xbf16> to vector<192x64xbf16>
    %cst_57 = arith.constant dense<0.000000e+00> : vector<64x64xf32>
    %35 = tpu.matmul %32, %34, %cst_57 {dimension_numbers = #tpu.dot_dimension_numbers<[1], [0], [0], [1], [0, 0, 1, 1], [], []>} : vector<64x192xbf16>, vector<192x64xbf16>, vector<64x64xf32> -> vector<64x64xf32>
    %36 = arith.addf %24, %35 : vector<64x64xf32>
    %c0_58 = arith.constant 0 : index
    %c2_59 = arith.constant 2 : index
    %c0_60 = arith.constant 0 : index
    %c0_61 = arith.constant 0 : index
    %37 = vector.load %arg7[%c0_58, %c2_59, %c0_60, %c0_61] : memref<1x10x10x64xf32, #tpu.memory_space<vmem>>, vector<1x8x8x64xf32>
    %38 = vector.shape_cast %37 : vector<1x8x8x64xf32> to vector<64x64xf32>
    %c0_62 = arith.constant 0 : index
    %c2_63 = arith.constant 2 : index
    %c1_64 = arith.constant 1 : index
    %c0_65 = arith.constant 0 : index
    %39 = vector.load %arg7[%c0_62, %c2_63, %c1_64, %c0_65] : memref<1x10x10x64xf32, #tpu.memory_space<vmem>>, vector<1x8x8x64xf32>
    %40 = vector.shape_cast %39 : vector<1x8x8x64xf32> to vector<64x64xf32>
    %c0_66 = arith.constant 0 : index
    %c2_67 = arith.constant 2 : index
    %c2_68 = arith.constant 2 : index
    %c0_69 = arith.constant 0 : index
    %41 = vector.load %arg7[%c0_66, %c2_67, %c2_68, %c0_69] : memref<1x10x10x64xf32, #tpu.memory_space<vmem>>, vector<1x8x8x64xf32>
    %42 = vector.shape_cast %41 : vector<1x8x8x64xf32> to vector<64x64xf32>
    %43 = tpu.concatenate %38, %40, %42 in 1 : vector<64x64xf32>, vector<64x64xf32>, vector<64x64xf32> -> vector<64x192xf32>
    %44 = arith.truncf %43 : vector<64x192xf32> to vector<64x192xbf16>
    %c2_70 = arith.constant 2 : index
    %c0_71 = arith.constant 0 : index
    %c0_72 = arith.constant 0 : index
    %45 = vector.load %arg2[%c2_70, %c0_71, %c0_72] : memref<3x192x64xbf16, #tpu.memory_space<vmem>>, vector<1x192x64xbf16>
    %46 = vector.shape_cast %45 : vector<1x192x64xbf16> to vector<192x64xbf16>
    %cst_73 = arith.constant dense<0.000000e+00> : vector<64x64xf32>
    %47 = tpu.matmul %44, %46, %cst_73 {dimension_numbers = #tpu.dot_dimension_numbers<[1], [0], [0], [1], [0, 0, 1, 1], [], []>} : vector<64x192xbf16>, vector<192x64xbf16>, vector<64x64xf32> -> vector<64x64xf32>
    %48 = arith.addf %36, %47 : vector<64x64xf32>
    %49 = vector.shape_cast %48 : vector<64x64xf32> to vector<1x64x64xf32>
    %cst_74 = arith.constant dense<0.000000e+00> : vector<1x64xf32>
    %50 = vector.multi_reduction <add>, %49, %cst_74 [1] : vector<1x64x64xf32> to vector<1x64xf32>
    %51 = vector.shape_cast %50 : vector<1x64xf32> to vector<1x1x64xf32>
    %cst_75 = arith.constant 6.400000e+01 : f32
    %52 = vector.broadcast %cst_75 : f32 to vector<1x1x64xf32>
    %53 = arith.divf %51, %52 : vector<1x1x64xf32>
    %54 = vector.broadcast %53 : vector<1x1x64xf32> to vector<1x64x64xf32>
    %55 = arith.subf %49, %54 : vector<1x64x64xf32>
    %56 = arith.mulf %55, %55 : vector<1x64x64xf32>
    %cst_76 = arith.constant dense<0.000000e+00> : vector<1x64xf32>
    %57 = vector.multi_reduction <add>, %56, %cst_76 [1] : vector<1x64x64xf32> to vector<1x64xf32>
    %58 = vector.shape_cast %57 : vector<1x64xf32> to vector<1x1x64xf32>
    %cst_77 = arith.constant 6.400000e+01 : f32
    %59 = vector.broadcast %cst_77 : f32 to vector<1x1x64xf32>
    %60 = arith.divf %58, %59 : vector<1x1x64xf32>
    %cst_78 = arith.constant 9.99999974E-6 : f32
    %61 = vector.broadcast %cst_78 : f32 to vector<1x1x64xf32>
    %62 = arith.addf %60, %61 : vector<1x1x64xf32>
    %63 = math.rsqrt %62 : vector<1x1x64xf32>
    %64 = vector.broadcast %63 : vector<1x1x64xf32> to vector<1x64x64xf32>
    %65 = arith.mulf %55, %64 : vector<1x64x64xf32>
    %66 = vector.broadcast %1 : vector<1x1x64xf32> to vector<1x64x64xf32>
    %67 = arith.mulf %65, %66 : vector<1x64x64xf32>
    %68 = vector.broadcast %3 : vector<1x1x64xf32> to vector<1x64x64xf32>
    %69 = arith.addf %67, %68 : vector<1x64x64xf32>
    %cst_79 = arith.constant 0.000000e+00 : f32
    %70 = vector.broadcast %cst_79 : f32 to vector<1x64x64xf32>
    %71 = arith.cmpf ogt, %69, %70 : vector<1x64x64xf32>
    %cst_80 = arith.constant 1.000000e-01 : f32
    %72 = vector.broadcast %cst_80 : f32 to vector<1x64x64xf32>
    %73 = arith.mulf %72, %69 : vector<1x64x64xf32>
    %74 = arith.select %71, %69, %73 : vector<1x64x64xi1>, vector<1x64x64xf32>
    %75 = vector.shape_cast %74 : vector<1x64x64xf32> to vector<1x8x8x64xf32>
    %c0_81 = arith.constant 0 : index
    %c1_82 = arith.constant 1 : index
    %c1_83 = arith.constant 1 : index
    %c0_84 = arith.constant 0 : index
    %76 = vector.load %arg7[%c0_81, %c1_82, %c1_83, %c0_84] : memref<1x10x10x64xf32, #tpu.memory_space<vmem>>, vector<1x8x8x64xf32>
    tpu.vector_store %arg7[%c0_81, %c1_82, %c1_83, %c0_84], %75 {strides = array<i32>} : memref<1x10x10x64xf32, #tpu.memory_space<vmem>>, vector<1x8x8x64xf32>,
    %cst_85 = arith.constant 0.000000e+00 : f32
    %77 = vector.broadcast %cst_85 : f32 to vector<64x64xf32>
    %c0_86 = arith.constant 0 : index
    %c0_87 = arith.constant 0 : index
    %c0_88 = arith.constant 0 : index
    %c0_89 = arith.constant 0 : index
    %78 = vector.load %arg7[%c0_86, %c0_87, %c0_88, %c0_89] : memref<1x10x10x64xf32, #tpu.memory_space<vmem>>, vector<1x8x8x64xf32>
    %79 = vector.shape_cast %78 : vector<1x8x8x64xf32> to vector<64x64xf32>
    %c0_90 = arith.constant 0 : index
    %c0_91 = arith.constant 0 : index
    %c1_92 = arith.constant 1 : index
    %c0_93 = arith.constant 0 : index
    %80 = vector.load %arg7[%c0_90, %c0_91, %c1_92, %c0_93] : memref<1x10x10x64xf32, #tpu.memory_space<vmem>>, vector<1x8x8x64xf32>
    %81 = vector.shape_cast %80 : vector<1x8x8x64xf32> to vector<64x64xf32>
    %c0_94 = arith.constant 0 : index
    %c0_95 = arith.constant 0 : index
    %c2_96 = arith.constant 2 : index
    %c0_97 = arith.constant 0 : index
    %82 = vector.load %arg7[%c0_94, %c0_95, %c2_96, %c0_97] : memref<1x10x10x64xf32, #tpu.memory_space<vmem>>, vector<1x8x8x64xf32>
    %83 = vector.shape_cast %82 : vector<1x8x8x64xf32> to vector<64x64xf32>
    %84 = tpu.concatenate %79, %81, %83 in 1 : vector<64x64xf32>, vector<64x64xf32>, vector<64x64xf32> -> vector<64x192xf32>
    %85 = arith.truncf %84 : vector<64x192xf32> to vector<64x192xbf16>
    %c0_98 = arith.constant 0 : index
    %c0_99 = arith.constant 0 : index
    %c0_100 = arith.constant 0 : index
    %86 = vector.load %arg3[%c0_98, %c0_99, %c0_100] : memref<3x192x64xbf16, #tpu.memory_space<vmem>>, vector<1x192x64xbf16>
    %87 = vector.shape_cast %86 : vector<1x192x64xbf16> to vector<192x64xbf16>
    %cst_101 = arith.constant dense<0.000000e+00> : vector<64x64xf32>
    %88 = tpu.matmul %85, %87, %cst_101 {dimension_numbers = #tpu.dot_dimension_numbers<[1], [0], [0], [1], [0, 0, 1, 1], [], []>} : vector<64x192xbf16>, vector<192x64xbf16>, vector<64x64xf32> -> vector<64x64xf32>
    %89 = arith.addf %77, %88 : vector<64x64xf32>
    %c0_102 = arith.constant 0 : index
    %c1_103 = arith.constant 1 : index
    %c0_104 = arith.constant 0 : index
    %c0_105 = arith.constant 0 : index
    %90 = vector.load %arg7[%c0_102, %c1_103, %c0_104, %c0_105] : memref<1x10x10x64xf32, #tpu.memory_space<vmem>>, vector<1x8x8x64xf32>
    %91 = vector.shape_cast %90 : vector<1x8x8x64xf32> to vector<64x64xf32>
    %c0_106 = arith.constant 0 : index
    %c1_107 = arith.constant 1 : index
    %c1_108 = arith.constant 1 : index
    %c0_109 = arith.constant 0 : index
    %92 = vector.load %arg7[%c0_106, %c1_107, %c1_108, %c0_109] : memref<1x10x10x64xf32, #tpu.memory_space<vmem>>, vector<1x8x8x64xf32>
    %93 = vector.shape_cast %92 : vector<1x8x8x64xf32> to vector<64x64xf32>
    %c0_110 = arith.constant 0 : index
    %c1_111 = arith.constant 1 : index
    %c2_112 = arith.constant 2 : index
    %c0_113 = arith.constant 0 : index
    %94 = vector.load %arg7[%c0_110, %c1_111, %c2_112, %c0_113] : memref<1x10x10x64xf32, #tpu.memory_space<vmem>>, vector<1x8x8x64xf32>
    %95 = vector.shape_cast %94 : vector<1x8x8x64xf32> to vector<64x64xf32>
    %96 = tpu.concatenate %91, %93, %95 in 1 : vector<64x64xf32>, vector<64x64xf32>, vector<64x64xf32> -> vector<64x192xf32>
    %97 = arith.truncf %96 : vector<64x192xf32> to vector<64x192xbf16>
    %c1_114 = arith.constant 1 : index
    %c0_115 = arith.constant 0 : index
    %c0_116 = arith.constant 0 : index
    %98 = vector.load %arg3[%c1_114, %c0_115, %c0_116] : memref<3x192x64xbf16, #tpu.memory_space<vmem>>, vector<1x192x64xbf16>
    %99 = vector.shape_cast %98 : vector<1x192x64xbf16> to vector<192x64xbf16>
    %cst_117 = arith.constant dense<0.000000e+00> : vector<64x64xf32>
    %100 = tpu.matmul %97, %99, %cst_117 {dimension_numbers = #tpu.dot_dimension_numbers<[1], [0], [0], [1], [0, 0, 1, 1], [], []>} : vector<64x192xbf16>, vector<192x64xbf16>, vector<64x64xf32> -> vector<64x64xf32>
    %101 = arith.addf %89, %100 : vector<64x64xf32>
    %c0_118 = arith.constant 0 : index
    %c2_119 = arith.constant 2 : index
    %c0_120 = arith.constant 0 : index
    %c0_121 = arith.constant 0 : index
    %102 = vector.load %arg7[%c0_118, %c2_119, %c0_120, %c0_121] : memref<1x10x10x64xf32, #tpu.memory_space<vmem>>, vector<1x8x8x64xf32>
    %103 = vector.shape_cast %102 : vector<1x8x8x64xf32> to vector<64x64xf32>
    %c0_122 = arith.constant 0 : index
    %c2_123 = arith.constant 2 : index
    %c1_124 = arith.constant 1 : index
    %c0_125 = arith.constant 0 : index
    %104 = vector.load %arg7[%c0_122, %c2_123, %c1_124, %c0_125] : memref<1x10x10x64xf32, #tpu.memory_space<vmem>>, vector<1x8x8x64xf32>
    %105 = vector.shape_cast %104 : vector<1x8x8x64xf32> to vector<64x64xf32>
    %c0_126 = arith.constant 0 : index
    %c2_127 = arith.constant 2 : index
    %c2_128 = arith.constant 2 : index
    %c0_129 = arith.constant 0 : index
    %106 = vector.load %arg7[%c0_126, %c2_127, %c2_128, %c0_129] : memref<1x10x10x64xf32, #tpu.memory_space<vmem>>, vector<1x8x8x64xf32>
    %107 = vector.shape_cast %106 : vector<1x8x8x64xf32> to vector<64x64xf32>
    %108 = tpu.concatenate %103, %105, %107 in 1 : vector<64x64xf32>, vector<64x64xf32>, vector<64x64xf32> -> vector<64x192xf32>
    %109 = arith.truncf %108 : vector<64x192xf32> to vector<64x192xbf16>
    %c2_130 = arith.constant 2 : index
    %c0_131 = arith.constant 0 : index
    %c0_132 = arith.constant 0 : index
    %110 = vector.load %arg3[%c2_130, %c0_131, %c0_132] : memref<3x192x64xbf16, #tpu.memory_space<vmem>>, vector<1x192x64xbf16>
    %111 = vector.shape_cast %110 : vector<1x192x64xbf16> to vector<192x64xbf16>
    %cst_133 = arith.constant dense<0.000000e+00> : vector<64x64xf32>
    %112 = tpu.matmul %109, %111, %cst_133 {dimension_numbers = #tpu.dot_dimension_numbers<[1], [0], [0], [1], [0, 0, 1, 1], [], []>} : vector<64x192xbf16>, vector<192x64xbf16>, vector<64x64xf32> -> vector<64x64xf32>
    %113 = arith.addf %101, %112 : vector<64x64xf32>
    %114 = vector.shape_cast %113 : vector<64x64xf32> to vector<1x64x64xf32>
    %cst_134 = arith.constant dense<0.000000e+00> : vector<1x64xf32>
    %115 = vector.multi_reduction <add>, %114, %cst_134 [1] : vector<1x64x64xf32> to vector<1x64xf32>
    %116 = vector.shape_cast %115 : vector<1x64xf32> to vector<1x1x64xf32>
    %cst_135 = arith.constant 6.400000e+01 : f32
    %117 = vector.broadcast %cst_135 : f32 to vector<1x1x64xf32>
    %118 = arith.divf %116, %117 : vector<1x1x64xf32>
    %119 = vector.broadcast %118 : vector<1x1x64xf32> to vector<1x64x64xf32>
    %120 = arith.subf %114, %119 : vector<1x64x64xf32>
    %121 = arith.mulf %120, %120 : vector<1x64x64xf32>
    %cst_136 = arith.constant dense<0.000000e+00> : vector<1x64xf32>
    %122 = vector.multi_reduction <add>, %121, %cst_136 [1] : vector<1x64x64xf32> to vector<1x64xf32>
    %123 = vector.shape_cast %122 : vector<1x64xf32> to vector<1x1x64xf32>
    %cst_137 = arith.constant 6.400000e+01 : f32
    %124 = vector.broadcast %cst_137 : f32 to vector<1x1x64xf32>
    %125 = arith.divf %123, %124 : vector<1x1x64xf32>
    %cst_138 = arith.constant 9.99999974E-6 : f32
    %126 = vector.broadcast %cst_138 : f32 to vector<1x1x64xf32>
    %127 = arith.addf %125, %126 : vector<1x1x64xf32>
    %128 = math.rsqrt %127 : vector<1x1x64xf32>
    %129 = vector.broadcast %128 : vector<1x1x64xf32> to vector<1x64x64xf32>
    %130 = arith.mulf %120, %129 : vector<1x64x64xf32>
    %131 = vector.broadcast %1 : vector<1x1x64xf32> to vector<1x64x64xf32>
    %132 = arith.mulf %130, %131 : vector<1x64x64xf32>
    %133 = vector.broadcast %3 : vector<1x1x64xf32> to vector<1x64x64xf32>
    %134 = arith.addf %132, %133 : vector<1x64x64xf32>
    %135 = vector.shape_cast %134 : vector<1x64x64xf32> to vector<1x8x8x64xf32>
    %136 = arith.addf %135, %4 : vector<1x8x8x64xf32>
    %c0_139 = arith.constant 0 : index
    %c0_140 = arith.constant 0 : index
    %c0_141 = arith.constant 0 : index
    %c0_142 = arith.constant 0 : index
    %137 = vector.load %arg6[%c0_139, %c0_140, %c0_141, %c0_142] : memref<1x8x8x64xf32, #tpu.memory_space<vmem>>, vector<1x8x8x64xf32>
    tpu.vector_store %arg6[%c0_139, %c0_140, %c0_141, %c0_142], %136 {strides = array<i32>} : memref<1x8x8x64xf32, #tpu.memory_space<vmem>>, vector<1x8x8x64xf32>,
    return
  }
  func.func @transform_0(%arg0: i32) -> (i32, i32, i32, i32) {
    %c0_i32 = arith.constant 0 : i32
    %c0_i32_0 = arith.constant 0 : i32
    %c0_i32_1 = arith.constant 0 : i32
    %c0_i32_2 = arith.constant 0 : i32
    return %arg0, %c0_i32, %c0_i32_0, %c0_i32_1 : i32, i32, i32, i32
  }
  func.func @transform_1(%arg0: i32) -> (i32, i32, i32) {
    %c0_i32 = arith.constant 0 : i32
    %c0_i32_0 = arith.constant 0 : i32
    %c0_i32_1 = arith.constant 0 : i32
    %c0_i32_2 = arith.constant 0 : i32
    return %c0_i32, %c0_i32_0, %c0_i32_1 : i32, i32, i32
  }
  func.func @transform_2(%arg0: i32) -> (i32, i32, i32) {
    %c0_i32 = arith.constant 0 : i32
    %c0_i32_0 = arith.constant 0 : i32
    %c0_i32_1 = arith.constant 0 : i32
    %c0_i32_2 = arith.constant 0 : i32
    return %c0_i32, %c0_i32_0, %c0_i32_1 : i32, i32, i32
  }
  func.func @transform_3(%arg0: i32) -> (i32, i32) {
    %c0_i32 = arith.constant 0 : i32
    %c0_i32_0 = arith.constant 0 : i32
    %c0_i32_1 = arith.constant 0 : i32
    return %c0_i32, %c0_i32_0 : i32, i32
  }
  func.func @transform_4(%arg0: i32) -> (i32, i32) {
    %c0_i32 = arith.constant 0 : i32
    %c0_i32_0 = arith.constant 0 : i32
    %c0_i32_1 = arith.constant 0 : i32
    return %c0_i32, %c0_i32_0 : i32, i32
  }
  func.func @transform_5(%arg0: i32) -> (i32, i32, i32, i32) {
    %c0_i32 = arith.constant 0 : i32
    %c0_i32_0 = arith.constant 0 : i32
    %c0_i32_1 = arith.constant 0 : i32
    %c0_i32_2 = arith.constant 0 : i32
    return %arg0, %c0_i32, %c0_i32_0, %c0_i32_1 : i32, i32, i32, i32
  }
}

</mosaic_0001>

<llo_original>
// kernel: tpu_custom_call.1
$region0: #{tpu_custom_call.1}
  #allocation0 [shape = 'u32[]', space=smem, size = 0x4, offset = 0x4, fixed_abs, tag = 'smem constant byte address 0x4 - core index']
  #allocation1 [shape = 'u32[72,128]{1,0:T(1,128)}', space=vmem, size = 0x9000, scoped, tag = 'internal scratch']
  #allocation2 [shape = 'f32[1,10,10,64]{3,2,1,0:T(8,128)}', space=vmem, size = 0x14000, scoped, tag = 'scratch operand']
  %s0 = inlined_call_operand.vmem [shape: f32[2,8,8,64], index: 0, kind: input, shape index: {}]
  %s1 = inlined_call_operand.vmem [shape: bf16[3,192,64], index: 1, kind: input, shape index: {}]
  %s2 = inlined_call_operand.vmem [shape: bf16[3,192,64], index: 2, kind: input, shape index: {}]
  %s3 = inlined_call_operand.vmem [shape: f32[1,64], index: 3, kind: input, shape index: {}]
  %s4 = inlined_call_operand.vmem [shape: f32[1,64], index: 4, kind: input, shape index: {}]
  %s5 = inlined_call_operand.hbm [shape: f32[2,8,8,64], index: 5, kind: output, shape index: {}]
  %s6 = sld [smem:[#allocation0]]
  $region53: #{tpu_custom_call.1} parent=0
    _
  %s8 = ssub.s32 1, %s6
  %s9 = scalar_select 0, %s8, %s6
  $region1: #{tpu_custom_call.1} parent=0
    #allocation3 [shape = 'u8[65536]{0}', space=vmem, size = 0x10000, scoped, tag = 'output window, operand 0']
    #allocation4 [shape = 's32[2]{0}', space=sflag, size = 0x8, scoped, tag = 'scoped memory for tpu_custom_call.1']
    %10 = vsyncpa [#allocation4], 0
    %s11 = scalar_lea.sflag [#allocation4], 1
    %12 = vsyncpa %s11, 0
    loop: start=0, step=1, limit=4
    $region2: #{tpu_custom_call.1} parent=1 // loop_pre_header
      _
    $region3: #{tpu_custom_call.1} parent=1 // loop_header
      %s14 = sphi 0, %s18
      %p15 = scmp.ge.s32.totalorder %s14, 4
      %s24 = sphi 0, %s26
      %s27 = sphi 0, %s24
      %s28 = sphi 0, %s27
      %s44 = sphi 0, %s28
      %s48 = sphi 0, %s48
      %s50 = sphi 0, %s48
      %s51 = sphi 0, %s50
      %s65 = sphi 0, %s51
      %s69 = sphi 0, %s69
      %s71 = sphi 0, %s69
      %s72 = sphi 0, %s71
      %s86 = sphi 0, %s72
      %s90 = sphi 0, %s90
      %s92 = sphi 0, %s90
      %s93 = sphi 0, %s92
      %s107 = sphi 0, %s93
      %s111 = sphi 0, %s111
      %s113 = sphi 0, %s111
      %s114 = sphi 0, %s113
      %s128 = sphi 0, %s114
      %s134 = sphi 0, %s136
      %s137 = sphi 0, %s134
      %s138 = sphi 0, %s137
      %s154 = sphi 0, %s138
    $region4: #{tpu_custom_call.1} parent=1 // loop_header_branch
      %17 = sbr.rel (%p15) target = $region8
    $region5: #{tpu_custom_call.1} parent=1 // loop_body
      %s19 = ssub.s32 %s14, 1
      %s20 = ssub.s32 %s14, 2
      %s21 = sadd.s32 %s14, 1
      %s22 = ssub.s32 %s14, %s21
      %p23 = scmp.eq.s32.totalorder %s22, 0
      %s25 = sadd.s32 %s24, 1
      %s26 = scalar_select %p23, %s24, %s25
      %p29 = pneg %p23
      %p30 = scmp.eq.s32.totalorder %s14, 1
      %p31 = por %p29, %p30
      %p32 = scmp.ne.s32.totalorder %s24, %s27
      %p33 = scmp.eq.s32.totalorder %s14, 0
      %p34 = por %p32, %p33
      %p35 = scmp.ne.s32.totalorder %s24, %s27
      %p36 = scmp.eq.s32.totalorder %s19, 1
      %p37 = por %p35, %p36
      %p38 = scmp.ne.s32.totalorder %s27, %s28
      %p39 = scmp.eq.s32.totalorder %s19, 0
      %p40 = por %p38, %p39
      %p41 = scmp.ne.s32.totalorder %s27, %s28
      %p42 = scmp.eq.s32.totalorder %s20, 1
      %p43 = por %p41, %p42
      %p45 = scmp.ne.s32.totalorder %s28, %s44
      %p46 = scmp.eq.s32.totalorder %s20, 0
      %p47 = por %p45, %p46
      %s49 = sadd.s32 %s48, 1
      %p52 = scmp.eq.s32.totalorder %s14, 1
      %p53 = scmp.ne.s32.totalorder %s48, %s50
      %p54 = scmp.eq.s32.totalorder %s14, 0
      %p55 = por %p53, %p54
      %p56 = scmp.ne.s32.totalorder %s48, %s50
      %p57 = scmp.eq.s32.totalorder %s19, 1
      %p58 = por %p56, %p57
      %p59 = scmp.ne.s32.totalorder %s50, %s51
      %p60 = scmp.eq.s32.totalorder %s19, 0
      %p61 = por %p59, %p60
      %p62 = scmp.ne.s32.totalorder %s50, %s51
      %p63 = scmp.eq.s32.totalorder %s20, 1
      %p64 = por %p62, %p63
      %p66 = scmp.ne.s32.totalorder %s51, %s65
      %p67 = scmp.eq.s32.totalorder %s20, 0
      %p68 = por %p66, %p67
      %s70 = sadd.s32 %s69, 1
      %p73 = scmp.eq.s32.totalorder %s14, 1
      %p74 = scmp.ne.s32.totalorder %s69, %s71
      %p75 = scmp.eq.s32.totalorder %s14, 0
      %p76 = por %p74, %p75
      %p77 = scmp.ne.s32.totalorder %s69, %s71
      %p78 = scmp.eq.s32.totalorder %s19, 1
      %p79 = por %p77, %p78
      %p80 = scmp.ne.s32.totalorder %s71, %s72
      %p81 = scmp.eq.s32.totalorder %s19, 0
      %p82 = por %p80, %p81
      %p83 = scmp.ne.s32.totalorder %s71, %s72
      %p84 = scmp.eq.s32.totalorder %s20, 1
      %p85 = por %p83, %p84
      %p87 = scmp.ne.s32.totalorder %s72, %s86
      %p88 = scmp.eq.s32.totalorder %s20, 0
      %p89 = por %p87, %p88
      %s91 = sadd.s32 %s90, 1
      %p94 = scmp.eq.s32.totalorder %s14, 1
      %p95 = scmp.ne.s32.totalorder %s90, %s92
      %p96 = scmp.eq.s32.totalorder %s14, 0
      %p97 = por %p95, %p96
      %p98 = scmp.ne.s32.totalorder %s90, %s92
      %p99 = scmp.eq.s32.totalorder %s19, 1
      %p100 = por %p98, %p99
      %p101 = scmp.ne.s32.totalorder %s92, %s93
      %p102 = scmp.eq.s32.totalorder %s19, 0
      %p103 = por %p101, %p102
      %p104 = scmp.ne.s32.totalorder %s92, %s93
      %p105 = scmp.eq.s32.totalorder %s20, 1
      %p106 = por %p104, %p105
      %p108 = scmp.ne.s32.totalorder %s93, %s107
      %p109 = scmp.eq.s32.totalorder %s20, 0
      %p110 = por %p108, %p109
      %s112 = sadd.s32 %s111, 1
      %p115 = scmp.eq.s32.totalorder %s14, 1
      %p116 = scmp.ne.s32.totalorder %s111, %s113
      %p117 = scmp.eq.s32.totalorder %s14, 0
      %p118 = por %p116, %p117
      %p119 = scmp.ne.s32.totalorder %s111, %s113
      %p120 = scmp.eq.s32.totalorder %s19, 1
      %p121 = por %p119, %p120
      %p122 = scmp.ne.s32.totalorder %s113, %s114
      %p123 = scmp.eq.s32.totalorder %s19, 0
      %p124 = por %p122, %p123
      %p125 = scmp.ne.s32.totalorder %s113, %s114
      %p126 = scmp.eq.s32.totalorder %s20, 1
      %p127 = por %p125, %p126
      %p129 = scmp.ne.s32.totalorder %s114, %s128
      %p130 = scmp.eq.s32.totalorder %s20, 0
      %p131 = por %p129, %p130
      %s132 = ssub.s32 %s14, %s21
      %p133 = scmp.eq.s32.totalorder %s132, 0
      %s135 = sadd.s32 %s134, 1
      %s136 = scalar_select %p133, %s134, %s135
      %p139 = pneg %p133
      %p140 = scmp.eq.s32.totalorder %s14, 1
      %p141 = por %p139, %p140
      %p142 = scmp.ne.s32.totalorder %s134, %s137
      %p143 = scmp.eq.s32.totalorder %s14, 0
      %p144 = por %p142, %p143
      %p145 = scmp.ne.s32.totalorder %s134, %s137
      %p146 = scmp.eq.s32.totalorder %s19, 1
      %p147 = por %p145, %p146
      %p148 = scmp.ne.s32.totalorder %s137, %s138
      %p149 = scmp.eq.s32.totalorder %s19, 0
      %p150 = por %p148, %p149
      %p151 = scmp.ne.s32.totalorder %s137, %s138
      %p152 = scmp.eq.s32.totalorder %s20, 1
      %p153 = por %p151, %p152
      %p155 = scmp.ne.s32.totalorder %s138, %s154
      %p156 = scmp.eq.s32.totalorder %s20, 0
      %p157 = por %p155, %p156
      %p158 = scmp.le.s32.totalorder 1, %s14
      %p159 = scmp.lt.s32.totalorder %s14, 3
      %p160 = pnand %p158, %p159
      %p161 = pneg %p160
      // Predicated region
      $region9: #{tpu_custom_call.1} parent=5 // pred_check
        _
      $region10: #{tpu_custom_call.1} parent=5 // pred_check_branch
        %163 = sbr.rel (%p160) target = $region12
      $region11: #{tpu_custom_call.1} parent=5 // pred_region
        %s164 = ssub.s32 %s14, 1
        // Predicated region
        $region13: #{tpu_custom_call.1} parent=11 // pred_check
          %p165 = pneg %p61
        $region14: #{tpu_custom_call.1} parent=11 // pred_check_branch
          %167 = sbr.rel (%p165) target = $region16
        $region15: #{tpu_custom_call.1} parent=11 // pred_region
          _
        $region16: #{tpu_custom_call.1} parent=11 // pred_fallthru
          _
        // Predicated region
        $region17: #{tpu_custom_call.1} parent=11 // pred_check
          %p168 = pneg %p82
        $region18: #{tpu_custom_call.1} parent=11 // pred_check_branch
          %170 = sbr.rel (%p168) target = $region20
        $region19: #{tpu_custom_call.1} parent=11 // pred_region
          _
        $region20: #{tpu_custom_call.1} parent=11 // pred_fallthru
          _
        // Predicated region
        $region21: #{tpu_custom_call.1} parent=11 // pred_check
          %p171 = pneg %p103
        $region22: #{tpu_custom_call.1} parent=11 // pred_check_branch
          %173 = sbr.rel (%p171) target = $region24
        $region23: #{tpu_custom_call.1} parent=11 // pred_region
          _
        $region24: #{tpu_custom_call.1} parent=11 // pred_fallthru
          _
        // Predicated region
        $region25: #{tpu_custom_call.1} parent=11 // pred_check
          %p174 = pneg %p124
        $region26: #{tpu_custom_call.1} parent=11 // pred_check_branch
          %176 = sbr.rel (%p174) target = $region28
        $region27: #{tpu_custom_call.1} parent=11 // pred_region
          _
        $region28: #{tpu_custom_call.1} parent=11 // pred_fallthru
          _
      $region12: #{tpu_custom_call.1} parent=5 // pred_fallthru
        _
      %p177 = scmp.lt.s32.totalorder %s14, 2
      // Predicated region
      $region29: #{tpu_custom_call.1} parent=5 // pred_check
        %p178 = pneg %p177
      $region30: #{tpu_custom_call.1} parent=5 // pred_check_branch
        %180 = sbr.rel (%p178) target = $region32
      $region31: #{tpu_custom_call.1} parent=5 // pred_region
        // Predicated region
        $region33: #{tpu_custom_call.1} parent=31 // pred_check
          %p181 = pneg %p34
        $region34: #{tpu_custom_call.1} parent=31 // pred_check_branch
          %183 = sbr.rel (%p181) target = $region36
        $region35: #{tpu_custom_call.1} parent=31 // pred_region
          %p184 = scmp.lt.s32.totalorder %s14, 1
          %s185 = scalar_select %p184, %s14, 1
          %s186 = smul.addr %s185, 8
          %s187 = smul.addr %s186, 8
          %s188 = scalar_lea.vmem %s0, %s187
        $region36: #{tpu_custom_call.1} parent=31 // pred_fallthru
          _
      $region32: #{tpu_custom_call.1} parent=5 // pred_fallthru
        _
      %p189 = scmp.le.s32.totalorder 1, %s14
      %p190 = scmp.lt.s32.totalorder %s14, 3
      %p191 = pnand %p189, %p190
      %p192 = pneg %p191
      // Predicated region
      $region37: #{tpu_custom_call.1} parent=5 // pred_check
        _
      $region38: #{tpu_custom_call.1} parent=5 // pred_check_branch
        %194 = sbr.rel (%p191) target = $region40
      $region39: #{tpu_custom_call.1} parent=5 // pred_region
        %s195 = ssub.s32 %s14, 1
        %p196 = scmp.lt.s32.totalorder %s19, 1
        %s197 = scalar_select %p196, %s19, 1
        %s198 = smul.addr %s197, 8
        %s199 = smul.addr %s198, 8
        %s200 = scalar_lea.vmem %s0, %s199
        %p201 = pneg %p40
        %p202 = pneg %p37
        %p203 = pneg %p61
        %p204 = pneg %p58
        %p205 = pneg %p82
        %p206 = pneg %p79
        %p207 = pneg %p103
        %p208 = pneg %p100
        %p209 = pneg %p124
        %p210 = pneg %p121
        %p211 = pneg %p150
        %p212 = pneg %p147
        %s213 = sand.u32 %s137, 1
        %s214 = scalar_lea.sflag [#allocation4], %s213
        %s215 = sand.u32 %s137, 1
        %s216 = smul.addr %s215, 64
        %s217 = scalar_lea.vmem [#allocation3], %s216
        %p218 = scmp.lt.s32.totalorder %s19, 1
        %s219 = scalar_select %p218, %s19, 1
        %s220 = smul.addr %s219, 8
        %s221 = smul.addr %s220, 8
        %s222 = scalar_lea.vmem %s0, %s221
        %v224 = vld [vmem:[%s3] sm:$0x1]
        %v225 = vld [vmem:[%s4] sm:$0x1]
        %v226 = vld [vmem:[%s222] sm:$0xff]
        %v227 = vld [vmem:[%s222 + $0x8] sm:$0xff]
        %v228 = vld [vmem:[%s222 + $0x10] sm:$0xff]
        %v229 = vld [vmem:[%s222 + $0x18] sm:$0xff]
        %v230 = vld [vmem:[%s222 + $0x20] sm:$0xff]
        %v231 = vld [vmem:[%s222 + $0x28] sm:$0xff]
        %v232 = vld [vmem:[%s222 + $0x30] sm:$0xff]
        %v233 = vld [vmem:[%s222 + $0x38] sm:$0xff]
        %vm234 = vcmask 523264
        %235 = vst.msk [vmem:[#allocation2] sm:$0xff] %vm234, 0.0
        %vm236 = vcmask 517120
        %237 = vst.msk [vmem:[#allocation2 + $0x8] sm:$0x3] %vm236, 0.0
        %s238 = scalar_lea.vmem [#allocation2], 144
        %239 = vst.msk [vmem:[%s238] sm:$0xff] %vm234, 0.0
        %240 = vst.msk [vmem:[%s238 + $0x8] sm:$0x3] %vm236, 0.0
        %vm241 = vcmask 516096
        %242 = vst.msk [vmem:[#allocation2] sm:$0x1] %vm241, 0.0
        %243 = vst.msk [vmem:[#allocation2 + $0x10] sm:$0x1] %vm241, 0.0
        %244 = vst.msk [vmem:[#allocation2 + $0x20] sm:$0x1] %vm241, 0.0
        %245 = vst.msk [vmem:[#allocation2 + $0x30] sm:$0x1] %vm241, 0.0
        %246 = vst.msk [vmem:[#allocation2 + $0x40] sm:$0x1] %vm241, 0.0
        %247 = vst.msk [vmem:[#allocation2 + $0x50] sm:$0x1] %vm241, 0.0
        %248 = vst.msk [vmem:[#allocation2 + $0x60] sm:$0x1] %vm241, 0.0
        %249 = vst.msk [vmem:[#allocation2 + $0x70] sm:$0x1] %vm241, 0.0
        %250 = vst.msk [vmem:[#allocation2 + $0x80] sm:$0x1] %vm241, 0.0
        %251 = vst.msk [vmem:[#allocation2 + $0x90] sm:$0x1] %vm241, 0.0
        %252 = vst.msk [vmem:[#allocation2 + $0x9] sm:$0x1] %vm241, 0.0
        %253 = vst.msk [vmem:[#allocation2 + $0x19] sm:$0x1] %vm241, 0.0
        %254 = vst.msk [vmem:[#allocation2 + $0x29] sm:$0x1] %vm241, 0.0
        %255 = vst.msk [vmem:[#allocation2 + $0x39] sm:$0x1] %vm241, 0.0
        %256 = vst.msk [vmem:[#allocation2 + $0x49] sm:$0x1] %vm241, 0.0
        %257 = vst.msk [vmem:[#allocation2 + $0x59] sm:$0x1] %vm241, 0.0
        %258 = vst.msk [vmem:[#allocation2 + $0x69] sm:$0x1] %vm241, 0.0
        %259 = vst.msk [vmem:[#allocation2 + $0x79] sm:$0x1] %vm241, 0.0
        %260 = vst.msk [vmem:[#allocation2 + $0x89] sm:$0x1] %vm241, 0.0
        %261 = vst.msk [vmem:[#allocation2 + $0x99] sm:$0x1] %vm241, 0.0
        %s262 = scalar_lea.vmem [#allocation2], 16
        %263 = vst.msk [vmem:[%s262 + $0x1] sm:$0xff] %vm234, %v226
        %264 = vst.msk [vmem:[%s262 + $0x11] sm:$0xff] %vm234, %v227
        %265 = vst.msk [vmem:[%s262 + $0x21] sm:$0xff] %vm234, %v228
        %266 = vst.msk [vmem:[%s262 + $0x31] sm:$0xff] %vm234, %v229
        %267 = vst.msk [vmem:[%s262 + $0x41] sm:$0xff] %vm234, %v230
        %268 = vst.msk [vmem:[%s262 + $0x51] sm:$0xff] %vm234, %v231
        %269 = vst.msk [vmem:[%s262 + $0x61] sm:$0xff] %vm234, %v232
        %270 = vst.msk [vmem:[%s262 + $0x71] sm:$0xff] %vm234, %v233
        %v271 = vld [vmem:[#allocation2] sm:$0xff]
        %v272 = vld [vmem:[#allocation2 + $0x10] sm:$0xff]
        %v273 = vld [vmem:[#allocation2 + $0x20] sm:$0xff]
        %v274 = vld [vmem:[#allocation2 + $0x30] sm:$0xff]
        %v275 = vld [vmem:[#allocation2 + $0x40] sm:$0xff]
        %v276 = vld [vmem:[#allocation2 + $0x50] sm:$0xff]
        %v277 = vld [vmem:[#allocation2 + $0x60] sm:$0xff]
        %v278 = vld [vmem:[#allocation2 + $0x70] sm:$0xff]
        %v279 = vld [vmem:[#allocation2 + $0x1] sm:$0xff]
        %v280 = vld [vmem:[#allocation2 + $0x11] sm:$0xff]
        %v281 = vld [vmem:[#allocation2 + $0x21] sm:$0xff]
        %v282 = vld [vmem:[#allocation2 + $0x31] sm:$0xff]
        %v283 = vld [vmem:[#allocation2 + $0x41] sm:$0xff]
        %v284 = vld [vmem:[#allocation2 + $0x51] sm:$0xff]
        %v285 = vld [vmem:[#allocation2 + $0x61] sm:$0xff]
        %v286 = vld [vmem:[#allocation2 + $0x71] sm:$0xff]
        %v287 = vld [vmem:[#allocation2 + $0x2] sm:$0xff]
        %v288 = vld [vmem:[#allocation2 + $0x12] sm:$0xff]
        %v289 = vld [vmem:[#allocation2 + $0x22] sm:$0xff]
        %v290 = vld [vmem:[#allocation2 + $0x32] sm:$0xff]
        %v291 = vld [vmem:[#allocation2 + $0x42] sm:$0xff]
        %v292 = vld [vmem:[#allocation2 + $0x52] sm:$0xff]
        %v293 = vld [vmem:[#allocation2 + $0x62] sm:$0xff]
        %v294 = vld [vmem:[#allocation2 + $0x72] sm:$0xff]
        %303 = vrot.lane.b32.xlu0 %v279, 64
        %v304 = vpop.permute.xlu0 %303
        %305 = vrot.lane.b32.xlu0 %v280, 64
        %v306 = vpop.permute.xlu0 %305
        %307 = vrot.lane.b32.xlu0 %v281, 64
        %v308 = vpop.permute.xlu0 %307
        %309 = vrot.lane.b32.xlu0 %v282, 64
        %v310 = vpop.permute.xlu0 %309
        %311 = vrot.lane.b32.xlu0 %v283, 64
        %v312 = vpop.permute.xlu0 %311
        %313 = vrot.lane.b32.xlu0 %v284, 64
        %v314 = vpop.permute.xlu0 %313
        %315 = vrot.lane.b32.xlu0 %v285, 64
        %v316 = vpop.permute.xlu0 %315
        %317 = vrot.lane.b32.xlu0 %v286, 64
        %v318 = vpop.permute.xlu0 %317
        %v327 = vsel %vm234, %v271, %v304
        %v328 = vsel %vm234, %v272, %v306
        %v329 = vsel %vm234, %v273, %v308
        %v330 = vsel %vm234, %v274, %v310
        %v331 = vsel %vm234, %v275, %v312
        %v332 = vsel %vm234, %v276, %v314
        %v333 = vsel %vm234, %v277, %v316
        %v334 = vsel %vm234, %v278, %v318
        %v335 = vpack.c.bf16 %v328, %v327
        %v336 = vpack.c.bf16 %v288, %v287
        %v337 = vpack.c.bf16 %v330, %v329
        %v338 = vpack.c.bf16 %v290, %v289
        %v339 = vpack.c.bf16 %v332, %v331
        %v340 = vpack.c.bf16 %v292, %v291
        %v341 = vpack.c.bf16 %v334, %v333
        %v342 = vpack.c.bf16 %v294, %v293
        %v343 = vld [vmem:[%s1] sm:$0xf]
        %v344 = vld [vmem:[%s1 + $0x4] sm:$0xf]
        %v345 = vld [vmem:[%s1 + $0x8] sm:$0xf]
        %v346 = vld [vmem:[%s1 + $0xc] sm:$0xf]
        %v347 = vld [vmem:[%s1 + $0x10] sm:$0xf]
        %v348 = vld [vmem:[%s1 + $0x14] sm:$0xf]
        %v349 = vld [vmem:[%s1 + $0x18] sm:$0xf]
        %v350 = vld [vmem:[%s1 + $0x1c] sm:$0xf]
        %v351 = vld [vmem:[%s1 + $0x20] sm:$0xf]
        %v352 = vld [vmem:[%s1 + $0x24] sm:$0xf]
        %v353 = vld [vmem:[%s1 + $0x28] sm:$0xf]
        %v354 = vld [vmem:[%s1 + $0x2c] sm:$0xf]
        %v355 = vld [vmem:[%s1 + $0x30] sm:$0xf]
        %v356 = vld [vmem:[%s1 + $0x34] sm:$0xf]
        %v357 = vld [vmem:[%s1 + $0x38] sm:$0xf]
        %v358 = vld [vmem:[%s1 + $0x3c] sm:$0xf]
        %v359 = vld [vmem:[%s1 + $0x40] sm:$0xf]
        %v360 = vld [vmem:[%s1 + $0x44] sm:$0xf]
        %v361 = vld [vmem:[%s1 + $0x48] sm:$0xf]
        %v362 = vld [vmem:[%s1 + $0x4c] sm:$0xf]
        %v363 = vld [vmem:[%s1 + $0x50] sm:$0xf]
        %v364 = vld [vmem:[%s1 + $0x54] sm:$0xf]
        %v365 = vld [vmem:[%s1 + $0x58] sm:$0xf]
        %v366 = vld [vmem:[%s1 + $0x5c] sm:$0xf]
        %v367 = vld [vmem:[%s262] sm:$0xff]
        %v368 = vld [vmem:[%s262 + $0x10] sm:$0xff]
        %v369 = vld [vmem:[%s262 + $0x20] sm:$0xff]
        %v370 = vld [vmem:[%s262 + $0x30] sm:$0xff]
        %v371 = vld [vmem:[%s262 + $0x40] sm:$0xff]
        %v372 = vld [vmem:[%s262 + $0x50] sm:$0xff]
        %v373 = vld [vmem:[%s262 + $0x60] sm:$0xff]
        %v374 = vld [vmem:[%s262 + $0x70] sm:$0xff]
        %v375 = vld [vmem:[%s262 + $0x1] sm:$0xff]
        %v376 = vld [vmem:[%s262 + $0x11] sm:$0xff]
        %v377 = vld [vmem:[%s262 + $0x21] sm:$0xff]
        %v378 = vld [vmem:[%s262 + $0x31] sm:$0xff]
        %v379 = vld [vmem:[%s262 + $0x41] sm:$0xff]
        %v380 = vld [vmem:[%s262 + $0x51] sm:$0xff]
        %v381 = vld [vmem:[%s262 + $0x61] sm:$0xff]
        %v382 = vld [vmem:[%s262 + $0x71] sm:$0xff]
        %v383 = vld [vmem:[%s262 + $0x2] sm:$0xff]
        %v384 = vld [vmem:[%s262 + $0x12] sm:$0xff]
        %v385 = vld [vmem:[%s262 + $0x22] sm:$0xff]
        %v386 = vld [vmem:[%s262 + $0x32] sm:$0xff]
        %v387 = vld [vmem:[%s262 + $0x42] sm:$0xff]
        %v388 = vld [vmem:[%s262 + $0x52] sm:$0xff]
        %v389 = vld [vmem:[%s262 + $0x62] sm:$0xff]
        %v390 = vld [vmem:[%s262 + $0x72] sm:$0xff]
        %399 = vrot.lane.b32.xlu0 %v375, 64
        %v400 = vpop.permute.xlu0 %399
        %401 = vrot.lane.b32.xlu0 %v376, 64
        %v402 = vpop.permute.xlu0 %401
        %403 = vrot.lane.b32.xlu0 %v377, 64
        %v404 = vpop.permute.xlu0 %403
        %405 = vrot.lane.b32.xlu0 %v378, 64
        %v406 = vpop.permute.xlu0 %405
        %407 = vrot.lane.b32.xlu0 %v379, 64
        %v408 = vpop.permute.xlu0 %407
        %409 = vrot.lane.b32.xlu0 %v380, 64
        %v410 = vpop.permute.xlu0 %409
        %411 = vrot.lane.b32.xlu0 %v381, 64
        %v412 = vpop.permute.xlu0 %411
        %413 = vrot.lane.b32.xlu0 %v382, 64
        %v414 = vpop.permute.xlu0 %413
        %v423 = vsel %vm234, %v367, %v400
        %v424 = vsel %vm234, %v368, %v402
        %v425 = vsel %vm234, %v369, %v404
        %v426 = vsel %vm234, %v370, %v406
        %v427 = vsel %vm234, %v371, %v408
        %v428 = vsel %vm234, %v372, %v410
        %v429 = vsel %vm234, %v373, %v412
        %v430 = vsel %vm234, %v374, %v414
        %v431 = vpack.c.bf16 %v424, %v423
        %v432 = vpack.c.bf16 %v384, %v383
        %v433 = vpack.c.bf16 %v426, %v425
        %v434 = vpack.c.bf16 %v386, %v385
        %v435 = vpack.c.bf16 %v428, %v427
        %v436 = vpack.c.bf16 %v388, %v387
        %v437 = vpack.c.bf16 %v430, %v429
        %v438 = vpack.c.bf16 %v390, %v389
        %s439 = scalar_lea.vmem %s1, 96
        %v440 = vld [vmem:[%s439] sm:$0xf]
        %v441 = vld [vmem:[%s439 + $0x4] sm:$0xf]
        %v442 = vld [vmem:[%s439 + $0x8] sm:$0xf]
        %v443 = vld [vmem:[%s439 + $0xc] sm:$0xf]
        %v444 = vld [vmem:[%s439 + $0x10] sm:$0xf]
        %v445 = vld [vmem:[%s439 + $0x14] sm:$0xf]
        %v446 = vld [vmem:[%s439 + $0x18] sm:$0xf]
        %v447 = vld [vmem:[%s439 + $0x1c] sm:$0xf]
        %v448 = vld [vmem:[%s439 + $0x20] sm:$0xf]
        %v449 = vld [vmem:[%s439 + $0x24] sm:$0xf]
        %v450 = vld [vmem:[%s439 + $0x28] sm:$0xf]
        %v451 = vld [vmem:[%s439 + $0x2c] sm:$0xf]
        %v452 = vld [vmem:[%s439 + $0x30] sm:$0xf]
        %v453 = vld [vmem:[%s439 + $0x34] sm:$0xf]
        %v454 = vld [vmem:[%s439 + $0x38] sm:$0xf]
        %v455 = vld [vmem:[%s439 + $0x3c] sm:$0xf]
        %v456 = vld [vmem:[%s439 + $0x40] sm:$0xf]
        %v457 = vld [vmem:[%s439 + $0x44] sm:$0xf]
        %v458 = vld [vmem:[%s439 + $0x48] sm:$0xf]
        %v459 = vld [vmem:[%s439 + $0x4c] sm:$0xf]
        %v460 = vld [vmem:[%s439 + $0x50] sm:$0xf]
        %v461 = vld [vmem:[%s439 + $0x54] sm:$0xf]
        %v462 = vld [vmem:[%s439 + $0x58] sm:$0xf]
        %v463 = vld [vmem:[%s439 + $0x5c] sm:$0xf]
        %v488 = vunpack.c.l.b16 %v440
        %v489 = vunpack.c.l.b16 %v441
        %v490 = vunpack.c.l.b16 %v442
        %v491 = vunpack.c.l.b16 %v443
        %v492 = vunpack.c.l.b16 %v444
        %v493 = vunpack.c.l.b16 %v445
        %v494 = vunpack.c.l.b16 %v446
        %v495 = vunpack.c.l.b16 %v447
        %v496 = vunpack.c.l.b16 %v448
        %v497 = vunpack.c.l.b16 %v449
        %v498 = vunpack.c.l.b16 %v450
        %v499 = vunpack.c.l.b16 %v451
        %v500 = vunpack.c.l.b16 %v452
        %v501 = vunpack.c.l.b16 %v453
        %v502 = vunpack.c.l.b16 %v454
        %v503 = vunpack.c.l.b16 %v455
        %v504 = vunpack.c.l.b16 %v456
        %v505 = vunpack.c.l.b16 %v457
        %v506 = vunpack.c.l.b16 %v458
        %v507 = vunpack.c.l.b16 %v459
        %v508 = vunpack.c.l.b16 %v460
        %v509 = vunpack.c.l.b16 %v461
        %v510 = vunpack.c.l.b16 %v462
        %v511 = vunpack.c.l.b16 %v463
        %v512 = vpack.c.b16 %v489, %v488
        %v513 = vpack.c.b16 %v491, %v490
        %v514 = vpack.c.b16 %v493, %v492
        %v515 = vpack.c.b16 %v495, %v494
        %v516 = vpack.c.b16 %v497, %v496
        %v517 = vpack.c.b16 %v499, %v498
        %v518 = vpack.c.b16 %v501, %v500
        %v519 = vpack.c.b16 %v503, %v502
        %v520 = vpack.c.b16 %v505, %v504
        %v521 = vpack.c.b16 %v507, %v506
        %v522 = vpack.c.b16 %v509, %v508
        %v523 = vpack.c.b16 %v511, %v510
        %v537 = vsel %vm234, %v432, 0
        %v540 = vsel %vm234, %v434, 0
        %v543 = vsel %vm234, %v436, 0
        %v546 = vsel %vm234, %v438, 0
        %548 = vmatpush.bf16.msra.mxu0 %v519
        %549 = vmatpush.bf16.msra.mxu0 %v518
        %550 = vmatpush.bf16.msra.mxu0 %v517
        %551 = vmatpush.bf16.msra.mxu0 %v516
        %552 = vmatpush.bf16.msra.mxu0 %v515
        %553 = vmatpush.bf16.msra.mxu0 %v514
        %554 = vmatpush.bf16.msra.mxu0 %v513
        %555 = vmatpush.bf16.msra.mxu0 %v512
        %556 = vmatmul.bf16.gmra.mxu0 %v431
        %v557 = vpop.f32.mrf.mxu0
        %v558 = vadd.f32 0.0, %v557
        %v559 = vpop.f32.mrf.mxu0
        %v560 = vadd.f32 0.0, %v559
        %561 = vmatmul.bf16.gmra.mxu0 %v433
        %v562 = vpop.f32.mrf.mxu0
        %v563 = vadd.f32 0.0, %v562
        %v564 = vpop.f32.mrf.mxu0
        %v565 = vadd.f32 0.0, %v564
        %566 = vmatmul.bf16.gmra.mxu0 %v435
        %v567 = vpop.f32.mrf.mxu0
        %v568 = vadd.f32 0.0, %v567
        %v569 = vpop.f32.mrf.mxu0
        %v570 = vadd.f32 0.0, %v569
        %571 = vmatmul.bf16.gmra.mxu0 %v437
        %v572 = vpop.f32.mrf.mxu0
        %v573 = vadd.f32 0.0, %v572
        %v574 = vpop.f32.mrf.mxu0
        %v575 = vadd.f32 0.0, %v574
        %576 = vdwg.mxu0
        %577 = vmatpush.bf16.msra.mxu0 0
        %578 = vmatpush.bf16.msra.mxu0 0
        %579 = vmatpush.bf16.msra.mxu0 0
        %580 = vmatpush.bf16.msra.mxu0 0
        %581 = vmatpush.bf16.msra.mxu0 %v523
        %582 = vmatpush.bf16.msra.mxu0 %v522
        %583 = vmatpush.bf16.msra.mxu0 %v521
        %584 = vmatpush.bf16.msra.mxu0 %v520
        %585 = vmatmul.bf16.gmra.mxu0 %v537
        %v586 = vpop.f32.mrf.mxu0
        %v587 = vadd.f32 %v558, %v586
        %v588 = vpop.f32.mrf.mxu0
        %v589 = vadd.f32 %v560, %v588
        %590 = vmatmul.bf16.gmra.mxu0 %v540
        %v591 = vpop.f32.mrf.mxu0
        %v592 = vadd.f32 %v563, %v591
        %v593 = vpop.f32.mrf.mxu0
        %v594 = vadd.f32 %v565, %v593
        %595 = vmatmul.bf16.gmra.mxu0 %v543
        %v596 = vpop.f32.mrf.mxu0
        %v597 = vadd.f32 %v568, %v596
        %v598 = vpop.f32.mrf.mxu0
        %v599 = vadd.f32 %v570, %v598
        %600 = vmatmul.bf16.gmra.mxu0 %v546
        %v601 = vpop.f32.mrf.mxu0
        %v602 = vadd.f32 %v573, %v601
        %v603 = vpop.f32.mrf.mxu0
        %v604 = vadd.f32 %v575, %v603
        %605 = vdwg.mxu0
        %v630 = vunpack.c.l.b16 %v343
        %v631 = vunpack.c.l.b16 %v344
        %v632 = vunpack.c.l.b16 %v345
        %v633 = vunpack.c.l.b16 %v346
        %v634 = vunpack.c.l.b16 %v347
        %v635 = vunpack.c.l.b16 %v348
        %v636 = vunpack.c.l.b16 %v349
        %v637 = vunpack.c.l.b16 %v350
        %v638 = vunpack.c.l.b16 %v351
        %v639 = vunpack.c.l.b16 %v352
        %v640 = vunpack.c.l.b16 %v353
        %v641 = vunpack.c.l.b16 %v354
        %v642 = vunpack.c.l.b16 %v355
        %v643 = vunpack.c.l.b16 %v356
        %v644 = vunpack.c.l.b16 %v357
        %v645 = vunpack.c.l.b16 %v358
        %v646 = vunpack.c.l.b16 %v359
        %v647 = vunpack.c.l.b16 %v360
        %v648 = vunpack.c.l.b16 %v361
        %v649 = vunpack.c.l.b16 %v362
        %v650 = vunpack.c.l.b16 %v363
        %v651 = vunpack.c.l.b16 %v364
        %v652 = vunpack.c.l.b16 %v365
        %v653 = vunpack.c.l.b16 %v366
        %v654 = vpack.c.b16 %v631, %v630
        %v655 = vpack.c.b16 %v633, %v632
        %v656 = vpack.c.b16 %v635, %v634
        %v657 = vpack.c.b16 %v637, %v636
        %v658 = vpack.c.b16 %v639, %v638
        %v659 = vpack.c.b16 %v641, %v640
        %v660 = vpack.c.b16 %v643, %v642
        %v661 = vpack.c.b16 %v645, %v644
        %v662 = vpack.c.b16 %v647, %v646
        %v663 = vpack.c.b16 %v649, %v648
        %v664 = vpack.c.b16 %v651, %v650
        %v665 = vpack.c.b16 %v653, %v652
        %v679 = vsel %vm234, %v336, 0
        %v682 = vsel %vm234, %v338, 0
        %v685 = vsel %vm234, %v340, 0
        %v688 = vsel %vm234, %v342, 0
        %690 = vmatpush.bf16.msra.mxu0 %v661
        %691 = vmatpush.bf16.msra.mxu0 %v660
        %692 = vmatpush.bf16.msra.mxu0 %v659
        %693 = vmatpush.bf16.msra.mxu0 %v658
        %694 = vmatpush.bf16.msra.mxu0 %v657
        %695 = vmatpush.bf16.msra.mxu0 %v656
        %696 = vmatpush.bf16.msra.mxu0 %v655
        %697 = vmatpush.bf16.msra.mxu0 %v654
        %698 = vmatmul.bf16.gmra.mxu0 %v335
        %v699 = vpop.f32.mrf.mxu0
        %v700 = vadd.f32 %v587, %v699
        %v701 = vpop.f32.mrf.mxu0
        %v702 = vadd.f32 %v589, %v701
        %703 = vmatmul.bf16.gmra.mxu0 %v337
        %v704 = vpop.f32.mrf.mxu0
        %v705 = vadd.f32 %v592, %v704
        %v706 = vpop.f32.mrf.mxu0
        %v707 = vadd.f32 %v594, %v706
        %708 = vmatmul.bf16.gmra.mxu0 %v339
        %v709 = vpop.f32.mrf.mxu0
        %v710 = vadd.f32 %v597, %v709
        %v711 = vpop.f32.mrf.mxu0
        %v712 = vadd.f32 %v599, %v711
        %713 = vmatmul.bf16.gmra.mxu0 %v341
        %v714 = vpop.f32.mrf.mxu0
        %v715 = vadd.f32 %v602, %v714
        %v716 = vpop.f32.mrf.mxu0
        %v717 = vadd.f32 %v604, %v716
        %718 = vdwg.mxu0
        %719 = vmatpush.bf16.msra.mxu0 0
        %720 = vmatpush.bf16.msra.mxu0 0
        %721 = vmatpush.bf16.msra.mxu0 0
        %722 = vmatpush.bf16.msra.mxu0 0
        %723 = vmatpush.bf16.msra.mxu0 %v665
        %724 = vmatpush.bf16.msra.mxu0 %v664
        %725 = vmatpush.bf16.msra.mxu0 %v663
        %726 = vmatpush.bf16.msra.mxu0 %v662
        %727 = vmatmul.bf16.gmra.mxu0 %v679
        %v728 = vpop.f32.mrf.mxu0
        %v729 = vadd.f32 %v700, %v728
        %v730 = vpop.f32.mrf.mxu0
        %v731 = vadd.f32 %v702, %v730
        %732 = vmatmul.bf16.gmra.mxu0 %v682
        %v733 = vpop.f32.mrf.mxu0
        %v734 = vadd.f32 %v705, %v733
        %v735 = vpop.f32.mrf.mxu0
        %v736 = vadd.f32 %v707, %v735
        %737 = vmatmul.bf16.gmra.mxu0 %v685
        %v738 = vpop.f32.mrf.mxu0
        %v739 = vadd.f32 %v710, %v738
        %v740 = vpop.f32.mrf.mxu0
        %v741 = vadd.f32 %v712, %v740
        %742 = vmatmul.bf16.gmra.mxu0 %v688
        %v743 = vpop.f32.mrf.mxu0
        %v744 = vadd.f32 %v715, %v743
        %v745 = vpop.f32.mrf.mxu0
        %v746 = vadd.f32 %v717, %v745
        %747 = vdwg.mxu0
        %s748 = scalar_lea.vmem [#allocation2], 32
        %v749 = vld [vmem:[%s748] sm:$0xff]
        %v750 = vld [vmem:[%s748 + $0x10] sm:$0xff]
        %v751 = vld [vmem:[%s748 + $0x20] sm:$0xff]
        %v752 = vld [vmem:[%s748 + $0x30] sm:$0xff]
        %v753 = vld [vmem:[%s748 + $0x40] sm:$0xff]
        %v754 = vld [vmem:[%s748 + $0x50] sm:$0xff]
        %v755 = vld [vmem:[%s748 + $0x60] sm:$0xff]
        %v756 = vld [vmem:[%s748 + $0x70] sm:$0xff]
        %v757 = vld [vmem:[%s748 + $0x1] sm:$0xff]
        %v758 = vld [vmem:[%s748 + $0x11] sm:$0xff]
        %v759 = vld [vmem:[%s748 + $0x21] sm:$0xff]
        %v760 = vld [vmem:[%s748 + $0x31] sm:$0xff]
        %v761 = vld [vmem:[%s748 + $0x41] sm:$0xff]
        %v762 = vld [vmem:[%s748 + $0x51] sm:$0xff]
        %v763 = vld [vmem:[%s748 + $0x61] sm:$0xff]
        %v764 = vld [vmem:[%s748 + $0x71] sm:$0xff]
        %v765 = vld [vmem:[%s748 + $0x2] sm:$0xff]
        %v766 = vld [vmem:[%s748 + $0x12] sm:$0xff]
        %v767 = vld [vmem:[%s748 + $0x22] sm:$0xff]
        %v768 = vld [vmem:[%s748 + $0x32] sm:$0xff]
        %v769 = vld [vmem:[%s748 + $0x42] sm:$0xff]
        %v770 = vld [vmem:[%s748 + $0x52] sm:$0xff]
        %v771 = vld [vmem:[%s748 + $0x62] sm:$0xff]
        %v772 = vld [vmem:[%s748 + $0x72] sm:$0xff]
        %781 = vrot.lane.b32.xlu0 %v757, 64
        %v782 = vpop.permute.xlu0 %781
        %783 = vrot.lane.b32.xlu0 %v758, 64
        %v784 = vpop.permute.xlu0 %783
        %785 = vrot.lane.b32.xlu0 %v759, 64
        %v786 = vpop.permute.xlu0 %785
        %787 = vrot.lane.b32.xlu0 %v760, 64
        %v788 = vpop.permute.xlu0 %787
        %789 = vrot.lane.b32.xlu0 %v761, 64
        %v790 = vpop.permute.xlu0 %789
        %791 = vrot.lane.b32.xlu0 %v762, 64
        %v792 = vpop.permute.xlu0 %791
        %793 = vrot.lane.b32.xlu0 %v763, 64
        %v794 = vpop.permute.xlu0 %793
        %795 = vrot.lane.b32.xlu0 %v764, 64
        %v796 = vpop.permute.xlu0 %795
        %v805 = vsel %vm234, %v749, %v782
        %v806 = vsel %vm234, %v750, %v784
        %v807 = vsel %vm234, %v751, %v786
        %v808 = vsel %vm234, %v752, %v788
        %v809 = vsel %vm234, %v753, %v790
        %v810 = vsel %vm234, %v754, %v792
        %v811 = vsel %vm234, %v755, %v794
        %v812 = vsel %vm234, %v756, %v796
        %v813 = vpack.c.bf16 %v806, %v805
        %v814 = vpack.c.bf16 %v766, %v765
        %v815 = vpack.c.bf16 %v808, %v807
        %v816 = vpack.c.bf16 %v768, %v767
        %v817 = vpack.c.bf16 %v810, %v809
        %v818 = vpack.c.bf16 %v770, %v769
        %v819 = vpack.c.bf16 %v812, %v811
        %v820 = vpack.c.bf16 %v772, %v771
        %s821 = scalar_lea.vmem %s1, 192
        %v822 = vld [vmem:[%s821] sm:$0xf]
        %v823 = vld [vmem:[%s821 + $0x4] sm:$0xf]
        %v824 = vld [vmem:[%s821 + $0x8] sm:$0xf]
        %v825 = vld [vmem:[%s821 + $0xc] sm:$0xf]
        %v826 = vld [vmem:[%s821 + $0x10] sm:$0xf]
        %v827 = vld [vmem:[%s821 + $0x14] sm:$0xf]
        %v828 = vld [vmem:[%s821 + $0x18] sm:$0xf]
        %v829 = vld [vmem:[%s821 + $0x1c] sm:$0xf]
        %v830 = vld [vmem:[%s821 + $0x20] sm:$0xf]
        %v831 = vld [vmem:[%s821 + $0x24] sm:$0xf]
        %v832 = vld [vmem:[%s821 + $0x28] sm:$0xf]
        %v833 = vld [vmem:[%s821 + $0x2c] sm:$0xf]
        %v834 = vld [vmem:[%s821 + $0x30] sm:$0xf]
        %v835 = vld [vmem:[%s821 + $0x34] sm:$0xf]
        %v836 = vld [vmem:[%s821 + $0x38] sm:$0xf]
        %v837 = vld [vmem:[%s821 + $0x3c] sm:$0xf]
        %v838 = vld [vmem:[%s821 + $0x40] sm:$0xf]
        %v839 = vld [vmem:[%s821 + $0x44] sm:$0xf]
        %v840 = vld [vmem:[%s821 + $0x48] sm:$0xf]
        %v841 = vld [vmem:[%s821 + $0x4c] sm:$0xf]
        %v842 = vld [vmem:[%s821 + $0x50] sm:$0xf]
        %v843 = vld [vmem:[%s821 + $0x54] sm:$0xf]
        %v844 = vld [vmem:[%s821 + $0x58] sm:$0xf]
        %v845 = vld [vmem:[%s821 + $0x5c] sm:$0xf]
        %v870 = vunpack.c.l.b16 %v822
        %v871 = vunpack.c.l.b16 %v823
        %v872 = vunpack.c.l.b16 %v824
        %v873 = vunpack.c.l.b16 %v825
        %v874 = vunpack.c.l.b16 %v826
        %v875 = vunpack.c.l.b16 %v827
        %v876 = vunpack.c.l.b16 %v828
        %v877 = vunpack.c.l.b16 %v829
        %v878 = vunpack.c.l.b16 %v830
        %v879 = vunpack.c.l.b16 %v831
        %v880 = vunpack.c.l.b16 %v832
        %v881 = vunpack.c.l.b16 %v833
        %v882 = vunpack.c.l.b16 %v834
        %v883 = vunpack.c.l.b16 %v835
        %v884 = vunpack.c.l.b16 %v836
        %v885 = vunpack.c.l.b16 %v837
        %v886 = vunpack.c.l.b16 %v838
        %v887 = vunpack.c.l.b16 %v839
        %v888 = vunpack.c.l.b16 %v840
        %v889 = vunpack.c.l.b16 %v841
        %v890 = vunpack.c.l.b16 %v842
        %v891 = vunpack.c.l.b16 %v843
        %v892 = vunpack.c.l.b16 %v844
        %v893 = vunpack.c.l.b16 %v845
        %v894 = vpack.c.b16 %v871, %v870
        %v895 = vpack.c.b16 %v873, %v872
        %v896 = vpack.c.b16 %v875, %v874
        %v897 = vpack.c.b16 %v877, %v876
        %v898 = vpack.c.b16 %v879, %v878
        %v899 = vpack.c.b16 %v881, %v880
        %v900 = vpack.c.b16 %v883, %v882
        %v901 = vpack.c.b16 %v885, %v884
        %v902 = vpack.c.b16 %v887, %v886
        %v903 = vpack.c.b16 %v889, %v888
        %v904 = vpack.c.b16 %v891, %v890
        %v905 = vpack.c.b16 %v893, %v892
        %v919 = vsel %vm234, %v814, 0
        %v922 = vsel %vm234, %v816, 0
        %v925 = vsel %vm234, %v818, 0
        %v928 = vsel %vm234, %v820, 0
        %930 = vmatpush.bf16.msra.mxu0 %v901
        %931 = vmatpush.bf16.msra.mxu0 %v900
        %932 = vmatpush.bf16.msra.mxu0 %v899
        %933 = vmatpush.bf16.msra.mxu0 %v898
        %934 = vmatpush.bf16.msra.mxu0 %v897
        %935 = vmatpush.bf16.msra.mxu0 %v896
        %936 = vmatpush.bf16.msra.mxu0 %v895
        %937 = vmatpush.bf16.msra.mxu0 %v894
        %938 = vmatmul.bf16.gmra.mxu0 %v813
        %v939 = vpop.f32.mrf.mxu0
        %v940 = vadd.f32 0.0, %v939
        %v941 = vpop.f32.mrf.mxu0
        %v942 = vadd.f32 0.0, %v941
        %943 = vmatmul.bf16.gmra.mxu0 %v815
        %v944 = vpop.f32.mrf.mxu0
        %v945 = vadd.f32 0.0, %v944
        %v946 = vpop.f32.mrf.mxu0
        %v947 = vadd.f32 0.0, %v946
        %948 = vmatmul.bf16.gmra.mxu0 %v817
        %v949 = vpop.f32.mrf.mxu0
        %v950 = vadd.f32 0.0, %v949
        %v951 = vpop.f32.mrf.mxu0
        %v952 = vadd.f32 0.0, %v951
        %953 = vmatmul.bf16.gmra.mxu0 %v819
        %v954 = vpop.f32.mrf.mxu0
        %v955 = vadd.f32 0.0, %v954
        %v956 = vpop.f32.mrf.mxu0
        %v957 = vadd.f32 0.0, %v956
        %958 = vdwg.mxu0
        %959 = vmatpush.bf16.msra.mxu0 0
        %960 = vmatpush.bf16.msra.mxu0 0
        %961 = vmatpush.bf16.msra.mxu0 0
        %962 = vmatpush.bf16.msra.mxu0 0
        %963 = vmatpush.bf16.msra.mxu0 %v905
        %964 = vmatpush.bf16.msra.mxu0 %v904
        %965 = vmatpush.bf16.msra.mxu0 %v903
        %966 = vmatpush.bf16.msra.mxu0 %v902
        %967 = vmatmul.bf16.gmra.mxu0 %v919
        %v968 = vpop.f32.mrf.mxu0
        %v969 = vadd.f32 %v940, %v968
        %v970 = vpop.f32.mrf.mxu0
        %v971 = vadd.f32 %v942, %v970
        %972 = vmatmul.bf16.gmra.mxu0 %v922
        %v973 = vpop.f32.mrf.mxu0
        %v974 = vadd.f32 %v945, %v973
        %v975 = vpop.f32.mrf.mxu0
        %v976 = vadd.f32 %v947, %v975
        %977 = vmatmul.bf16.gmra.mxu0 %v925
        %v978 = vpop.f32.mrf.mxu0
        %v979 = vadd.f32 %v950, %v978
        %v980 = vpop.f32.mrf.mxu0
        %v981 = vadd.f32 %v952, %v980
        %982 = vmatmul.bf16.gmra.mxu0 %v928
        %v983 = vpop.f32.mrf.mxu0
        %v984 = vadd.f32 %v955, %v983
        %v985 = vpop.f32.mrf.mxu0
        %v986 = vadd.f32 %v957, %v985
        %987 = vdwg.mxu0
        %v988 = vadd.f32 %v729, %v969
        %v989 = vadd.f32 %v731, %v971
        %v990 = vadd.f32 %v734, %v974
        %v991 = vadd.f32 %v736, %v976
        %v992 = vadd.f32 %v739, %v979
        %v993 = vadd.f32 %v741, %v981
        %v994 = vadd.f32 %v744, %v984
        %v995 = vadd.f32 %v746, %v986
        %v996 = vsel %vm234, %v988, 0.0
        %v997 = vsel %vm234, %v989, 0.0
        %v998 = vadd.f32 %v996, %v997
        %v999 = vsel %vm234, %v990, 0.0
        %v1000 = vadd.f32 %v998, %v999
        %v1001 = vsel %vm234, %v991, 0.0
        %v1002 = vadd.f32 %v1000, %v1001
        %v1003 = vsel %vm234, %v992, 0.0
        %v1004 = vadd.f32 %v1002, %v1003
        %v1005 = vsel %vm234, %v993, 0.0
        %v1006 = vadd.f32 %v1004, %v1005
        %v1007 = vsel %vm234, %v994, 0.0
        %v1008 = vadd.f32 %v1006, %v1007
        %v1009 = vsel %vm234, %v995, 0.0
        %v1010 = vadd.f32 %v1008, %v1009
        %v1011 = vrot.slane %v1010, 4
        %v1012 = vadd.f32 %v1010, %v1011
        %v1013 = vrot.slane %v1012, 2
        %v1014 = vadd.f32 %v1012, %v1013
        %v1015 = vrot.slane %v1014, 1
        %v1016 = vadd.f32 %v1014, %v1015
        %v1017 = vrcp.pop 64.0
        %v1018 = vmul.f32 64.0, %v1017
        %v1019 = vsub.f32 1.0, %v1018
        %v1020 = vmul.f32 %v1017, %v1019
        %v1021 = vadd.f32 %v1017, %v1020
        %vm1022 = vweird.f32 %v1017
        %v1023 = vsel %vm1022, %v1017, %v1021
        %v1024 = vmul.f32 %v1016, %v1023
        %v1025 = vsub.f32 %v988, %v1024
        %v1026 = vsub.f32 %v989, %v1024
        %v1027 = vsub.f32 %v990, %v1024
        %v1028 = vsub.f32 %v991, %v1024
        %v1029 = vsub.f32 %v992, %v1024
        %v1030 = vsub.f32 %v993, %v1024
        %v1031 = vsub.f32 %v994, %v1024
        %v1032 = vsub.f32 %v995, %v1024
        %v1033 = vmul.f32 %v1025, %v1025
        %v1034 = vmul.f32 %v1026, %v1026
        %v1035 = vmul.f32 %v1027, %v1027
        %v1036 = vmul.f32 %v1028, %v1028
        %v1037 = vmul.f32 %v1029, %v1029
        %v1038 = vmul.f32 %v1030, %v1030
        %v1039 = vmul.f32 %v1031, %v1031
        %v1040 = vmul.f32 %v1032, %v1032
        %v1041 = vsel %vm234, %v1033, 0.0
        %v1042 = vsel %vm234, %v1034, 0.0
        %v1043 = vadd.f32 %v1041, %v1042
        %v1044 = vsel %vm234, %v1035, 0.0
        %v1045 = vadd.f32 %v1043, %v1044
        %v1046 = vsel %vm234, %v1036, 0.0
        %v1047 = vadd.f32 %v1045, %v1046
        %v1048 = vsel %vm234, %v1037, 0.0
        %v1049 = vadd.f32 %v1047, %v1048
        %v1050 = vsel %vm234, %v1038, 0.0
        %v1051 = vadd.f32 %v1049, %v1050
        %v1052 = vsel %vm234, %v1039, 0.0
        %v1053 = vadd.f32 %v1051, %v1052
        %v1054 = vsel %vm234, %v1040, 0.0
        %v1055 = vadd.f32 %v1053, %v1054
        %v1056 = vrot.slane %v1055, 4
        %v1057 = vadd.f32 %v1055, %v1056
        %v1058 = vrot.slane %v1057, 2
        %v1059 = vadd.f32 %v1057, %v1058
        %v1060 = vrot.slane %v1059, 1
        %v1061 = vadd.f32 %v1059, %v1060
        %v1062 = vmul.f32 %v1061, %v1023
        %v1063 = vadd.f32 %v1062, 1e-05
        %v1064 = vrsqrt.pop %v1063
        %v1065 = vmul.f32 %v1064, %v1063
        %v1066 = vmul.f32 %v1065, %v1064
        %v1067 = vmul.f32 0.5, %v1066
        %v1068 = vsub.f32 1.5, %v1067
        %v1069 = vmul.f32 %v1064, %v1068
        %vm1070 = vweird.f32 %v1063
        %vm1071 = vweird.f32 %v1064
        %vm1072 = vmor %vm1070, %vm1071
        %v1073 = vsel %vm1072, %v1064, %v1069
        %v1074 = vmul.f32 %v1025, %v1073
        %v1075 = vmul.f32 %v1026, %v1073
        %v1076 = vmul.f32 %v1027, %v1073
        %v1077 = vmul.f32 %v1028, %v1073
        %v1078 = vmul.f32 %v1029, %v1073
        %v1079 = vmul.f32 %v1030, %v1073
        %v1080 = vmul.f32 %v1031, %v1073
        %v1081 = vmul.f32 %v1032, %v1073
        %v1083 = vperm.slane %v224, 0
        %v1085 = vmul.f32 %v1074, %v1083
        %v1086 = vmul.f32 %v1075, %v1083
        %v1087 = vmul.f32 %v1076, %v1083
        %v1088 = vmul.f32 %v1077, %v1083
        %v1089 = vmul.f32 %v1078, %v1083
        %v1090 = vmul.f32 %v1079, %v1083
        %v1091 = vmul.f32 %v1080, %v1083
        %v1092 = vmul.f32 %v1081, %v1083
        %v1094 = vperm.slane %v225, 0
        %v1096 = vadd.f32 %v1085, %v1094
        %v1097 = vadd.f32 %v1086, %v1094
        %v1098 = vadd.f32 %v1087, %v1094
        %v1099 = vadd.f32 %v1088, %v1094
        %v1100 = vadd.f32 %v1089, %v1094
        %v1101 = vadd.f32 %v1090, %v1094
        %v1102 = vadd.f32 %v1091, %v1094
        %v1103 = vadd.f32 %v1092, %v1094
        %vm1104 = vcmp.gt.f32.partialorder %v1096, 0.0
        %vm1105 = vcmp.gt.f32.partialorder %v1097, 0.0
        %vm1106 = vcmp.gt.f32.partialorder %v1098, 0.0
        %vm1107 = vcmp.gt.f32.partialorder %v1099, 0.0
        %vm1108 = vcmp.gt.f32.partialorder %v1100, 0.0
        %vm1109 = vcmp.gt.f32.partialorder %v1101, 0.0
        %vm1110 = vcmp.gt.f32.partialorder %v1102, 0.0
        %vm1111 = vcmp.gt.f32.partialorder %v1103, 0.0
        %v1112 = vmul.f32 %v1096, 0.1
        %v1113 = vmul.f32 %v1097, 0.1
        %v1114 = vmul.f32 %v1098, 0.1
        %v1115 = vmul.f32 %v1099, 0.1
        %v1116 = vmul.f32 %v1100, 0.1
        %v1117 = vmul.f32 %v1101, 0.1
        %v1118 = vmul.f32 %v1102, 0.1
        %v1119 = vmul.f32 %v1103, 0.1
        %v1120 = vsel %vm1104, %v1096, %v1112
        %v1121 = vsel %vm1105, %v1097, %v1113
        %v1122 = vsel %vm1106, %v1098, %v1114
        %v1123 = vsel %vm1107, %v1099, %v1115
        %v1124 = vsel %vm1108, %v1100, %v1116
        %v1125 = vsel %vm1109, %v1101, %v1117
        %v1126 = vsel %vm1110, %v1102, %v1118
        %v1127 = vsel %vm1111, %v1103, %v1119
        %1128 = vst.msk [vmem:[%s262 + $0x1] sm:$0xff] %vm234, %v1120
        %1129 = vst.msk [vmem:[%s262 + $0x11] sm:$0xff] %vm234, %v1121
        %1130 = vst.msk [vmem:[%s262 + $0x21] sm:$0xff] %vm234, %v1122
        %1131 = vst.msk [vmem:[%s262 + $0x31] sm:$0xff] %vm234, %v1123
        %1132 = vst.msk [vmem:[%s262 + $0x41] sm:$0xff] %vm234, %v1124
        %1133 = vst.msk [vmem:[%s262 + $0x51] sm:$0xff] %vm234, %v1125
        %1134 = vst.msk [vmem:[%s262 + $0x61] sm:$0xff] %vm234, %v1126
        %1135 = vst.msk [vmem:[%s262 + $0x71] sm:$0xff] %vm234, %v1127
        %v1136 = vld [vmem:[#allocation2] sm:$0xff]
        %v1137 = vld [vmem:[#allocation2 + $0x10] sm:$0xff]
        %v1138 = vld [vmem:[#allocation2 + $0x20] sm:$0xff]
        %v1139 = vld [vmem:[#allocation2 + $0x30] sm:$0xff]
        %v1140 = vld [vmem:[#allocation2 + $0x40] sm:$0xff]
        %v1141 = vld [vmem:[#allocation2 + $0x50] sm:$0xff]
        %v1142 = vld [vmem:[#allocation2 + $0x60] sm:$0xff]
        %v1143 = vld [vmem:[#allocation2 + $0x70] sm:$0xff]
        %v1144 = vld [vmem:[#allocation2 + $0x1] sm:$0xff]
        %v1145 = vld [vmem:[#allocation2 + $0x11] sm:$0xff]
        %v1146 = vld [vmem:[#allocation2 + $0x21] sm:$0xff]
        %v1147 = vld [vmem:[#allocation2 + $0x31] sm:$0xff]
        %v1148 = vld [vmem:[#allocation2 + $0x41] sm:$0xff]
        %v1149 = vld [vmem:[#allocation2 + $0x51] sm:$0xff]
        %v1150 = vld [vmem:[#allocation2 + $0x61] sm:$0xff]
        %v1151 = vld [vmem:[#allocation2 + $0x71] sm:$0xff]
        %v1152 = vld [vmem:[#allocation2 + $0x2] sm:$0xff]
        %v1153 = vld [vmem:[#allocation2 + $0x12] sm:$0xff]
        %v1154 = vld [vmem:[#allocation2 + $0x22] sm:$0xff]
        %v1155 = vld [vmem:[#allocation2 + $0x32] sm:$0xff]
        %v1156 = vld [vmem:[#allocation2 + $0x42] sm:$0xff]
        %v1157 = vld [vmem:[#allocation2 + $0x52] sm:$0xff]
        %v1158 = vld [vmem:[#allocation2 + $0x62] sm:$0xff]
        %v1159 = vld [vmem:[#allocation2 + $0x72] sm:$0xff]
        %1168 = vrot.lane.b32.xlu0 %v1144, 64
        %v1169 = vpop.permute.xlu0 %1168
        %1170 = vrot.lane.b32.xlu0 %v1145, 64
        %v1171 = vpop.permute.xlu0 %1170
        %1172 = vrot.lane.b32.xlu0 %v1146, 64
        %v1173 = vpop.permute.xlu0 %1172
        %1174 = vrot.lane.b32.xlu0 %v1147, 64
        %v1175 = vpop.permute.xlu0 %1174
        %1176 = vrot.lane.b32.xlu0 %v1148, 64
        %v1177 = vpop.permute.xlu0 %1176
        %1178 = vrot.lane.b32.xlu0 %v1149, 64
        %v1179 = vpop.permute.xlu0 %1178
        %1180 = vrot.lane.b32.xlu0 %v1150, 64
        %v1181 = vpop.permute.xlu0 %1180
        %1182 = vrot.lane.b32.xlu0 %v1151, 64
        %v1183 = vpop.permute.xlu0 %1182
        %v1192 = vsel %vm234, %v1136, %v1169
        %v1193 = vsel %vm234, %v1137, %v1171
        %v1194 = vsel %vm234, %v1138, %v1173
        %v1195 = vsel %vm234, %v1139, %v1175
        %v1196 = vsel %vm234, %v1140, %v1177
        %v1197 = vsel %vm234, %v1141, %v1179
        %v1198 = vsel %vm234, %v1142, %v1181
        %v1199 = vsel %vm234, %v1143, %v1183
        %v1200 = vpack.c.bf16 %v1193, %v1192
        %v1201 = vpack.c.bf16 %v1153, %v1152
        %v1202 = vpack.c.bf16 %v1195, %v1194
        %v1203 = vpack.c.bf16 %v1155, %v1154
        %v1204 = vpack.c.bf16 %v1197, %v1196
        %v1205 = vpack.c.bf16 %v1157, %v1156
        %v1206 = vpack.c.bf16 %v1199, %v1198
        %v1207 = vpack.c.bf16 %v1159, %v1158
        %v1208 = vld [vmem:[%s2] sm:$0xf]
        %v1209 = vld [vmem:[%s2 + $0x4] sm:$0xf]
        %v1210 = vld [vmem:[%s2 + $0x8] sm:$0xf]
        %v1211 = vld [vmem:[%s2 + $0xc] sm:$0xf]
        %v1212 = vld [vmem:[%s2 + $0x10] sm:$0xf]
        %v1213 = vld [vmem:[%s2 + $0x14] sm:$0xf]
        %v1214 = vld [vmem:[%s2 + $0x18] sm:$0xf]
        %v1215 = vld [vmem:[%s2 + $0x1c] sm:$0xf]
        %v1216 = vld [vmem:[%s2 + $0x20] sm:$0xf]
        %v1217 = vld [vmem:[%s2 + $0x24] sm:$0xf]
        %v1218 = vld [vmem:[%s2 + $0x28] sm:$0xf]
        %v1219 = vld [vmem:[%s2 + $0x2c] sm:$0xf]
        %v1220 = vld [vmem:[%s2 + $0x30] sm:$0xf]
        %v1221 = vld [vmem:[%s2 + $0x34] sm:$0xf]
        %v1222 = vld [vmem:[%s2 + $0x38] sm:$0xf]
        %v1223 = vld [vmem:[%s2 + $0x3c] sm:$0xf]
        %v1224 = vld [vmem:[%s2 + $0x40] sm:$0xf]
        %v1225 = vld [vmem:[%s2 + $0x44] sm:$0xf]
        %v1226 = vld [vmem:[%s2 + $0x48] sm:$0xf]
        %v1227 = vld [vmem:[%s2 + $0x4c] sm:$0xf]
        %v1228 = vld [vmem:[%s2 + $0x50] sm:$0xf]
        %v1229 = vld [vmem:[%s2 + $0x54] sm:$0xf]
        %v1230 = vld [vmem:[%s2 + $0x58] sm:$0xf]
        %v1231 = vld [vmem:[%s2 + $0x5c] sm:$0xf]
        %v1232 = vld [vmem:[%s262] sm:$0xff]
        %v1233 = vld [vmem:[%s262 + $0x10] sm:$0xff]
        %v1234 = vld [vmem:[%s262 + $0x20] sm:$0xff]
        %v1235 = vld [vmem:[%s262 + $0x30] sm:$0xff]
        %v1236 = vld [vmem:[%s262 + $0x40] sm:$0xff]
        %v1237 = vld [vmem:[%s262 + $0x50] sm:$0xff]
        %v1238 = vld [vmem:[%s262 + $0x60] sm:$0xff]
        %v1239 = vld [vmem:[%s262 + $0x70] sm:$0xff]
        %v1240 = vld [vmem:[%s262 + $0x1] sm:$0xff]
        %v1241 = vld [vmem:[%s262 + $0x11] sm:$0xff]
        %v1242 = vld [vmem:[%s262 + $0x21] sm:$0xff]
        %v1243 = vld [vmem:[%s262 + $0x31] sm:$0xff]
        %v1244 = vld [vmem:[%s262 + $0x41] sm:$0xff]
        %v1245 = vld [vmem:[%s262 + $0x51] sm:$0xff]
        %v1246 = vld [vmem:[%s262 + $0x61] sm:$0xff]
        %v1247 = vld [vmem:[%s262 + $0x71] sm:$0xff]
        %v1248 = vld [vmem:[%s262 + $0x2] sm:$0xff]
        %v1249 = vld [vmem:[%s262 + $0x12] sm:$0xff]
        %v1250 = vld [vmem:[%s262 + $0x22] sm:$0xff]
        %v1251 = vld [vmem:[%s262 + $0x32] sm:$0xff]
        %v1252 = vld [vmem:[%s262 + $0x42] sm:$0xff]
        %v1253 = vld [vmem:[%s262 + $0x52] sm:$0xff]
        %v1254 = vld [vmem:[%s262 + $0x62] sm:$0xff]
        %v1255 = vld [vmem:[%s262 + $0x72] sm:$0xff]
        %1264 = vrot.lane.b32.xlu0 %v1240, 64
        %v1265 = vpop.permute.xlu0 %1264
        %1266 = vrot.lane.b32.xlu0 %v1241, 64
        %v1267 = vpop.permute.xlu0 %1266
        %1268 = vrot.lane.b32.xlu0 %v1242, 64
        %v1269 = vpop.permute.xlu0 %1268
        %1270 = vrot.lane.b32.xlu0 %v1243, 64
        %v1271 = vpop.permute.xlu0 %1270
        %1272 = vrot.lane.b32.xlu0 %v1244, 64
        %v1273 = vpop.permute.xlu0 %1272
        %1274 = vrot.lane.b32.xlu0 %v1245, 64
        %v1275 = vpop.permute.xlu0 %1274
        %1276 = vrot.lane.b32.xlu0 %v1246, 64
        %v1277 = vpop.permute.xlu0 %1276
        %1278 = vrot.lane.b32.xlu0 %v1247, 64
        %v1279 = vpop.permute.xlu0 %1278
        %v1288 = vsel %vm234, %v1232, %v1265
        %v1289 = vsel %vm234, %v1233, %v1267
        %v1290 = vsel %vm234, %v1234, %v1269
        %v1291 = vsel %vm234, %v1235, %v1271
        %v1292 = vsel %vm234, %v1236, %v1273
        %v1293 = vsel %vm234, %v1237, %v1275
        %v1294 = vsel %vm234, %v1238, %v1277
        %v1295 = vsel %vm234, %v1239, %v1279
        %v1296 = vpack.c.bf16 %v1289, %v1288
        %v1297 = vpack.c.bf16 %v1249, %v1248
        %v1298 = vpack.c.bf16 %v1291, %v1290
        %v1299 = vpack.c.bf16 %v1251, %v1250
        %v1300 = vpack.c.bf16 %v1293, %v1292
        %v1301 = vpack.c.bf16 %v1253, %v1252
        %v1302 = vpack.c.bf16 %v1295, %v1294
        %v1303 = vpack.c.bf16 %v1255, %v1254
        %s1304 = scalar_lea.vmem %s2, 96
        %v1305 = vld [vmem:[%s1304] sm:$0xf]
        %v1306 = vld [vmem:[%s1304 + $0x4] sm:$0xf]
        %v1307 = vld [vmem:[%s1304 + $0x8] sm:$0xf]
        %v1308 = vld [vmem:[%s1304 + $0xc] sm:$0xf]
        %v1309 = vld [vmem:[%s1304 + $0x10] sm:$0xf]
        %v1310 = vld [vmem:[%s1304 + $0x14] sm:$0xf]
        %v1311 = vld [vmem:[%s1304 + $0x18] sm:$0xf]
        %v1312 = vld [vmem:[%s1304 + $0x1c] sm:$0xf]
        %v1313 = vld [vmem:[%s1304 + $0x20] sm:$0xf]
        %v1314 = vld [vmem:[%s1304 + $0x24] sm:$0xf]
        %v1315 = vld [vmem:[%s1304 + $0x28] sm:$0xf]
        %v1316 = vld [vmem:[%s1304 + $0x2c] sm:$0xf]
        %v1317 = vld [vmem:[%s1304 + $0x30] sm:$0xf]
        %v1318 = vld [vmem:[%s1304 + $0x34] sm:$0xf]
        %v1319 = vld [vmem:[%s1304 + $0x38] sm:$0xf]
        %v1320 = vld [vmem:[%s1304 + $0x3c] sm:$0xf]
        %v1321 = vld [vmem:[%s1304 + $0x40] sm:$0xf]
        %v1322 = vld [vmem:[%s1304 + $0x44] sm:$0xf]
        %v1323 = vld [vmem:[%s1304 + $0x48] sm:$0xf]
        %v1324 = vld [vmem:[%s1304 + $0x4c] sm:$0xf]
        %v1325 = vld [vmem:[%s1304 + $0x50] sm:$0xf]
        %v1326 = vld [vmem:[%s1304 + $0x54] sm:$0xf]
        %v1327 = vld [vmem:[%s1304 + $0x58] sm:$0xf]
        %v1328 = vld [vmem:[%s1304 + $0x5c] sm:$0xf]
        %v1353 = vunpack.c.l.b16 %v1305
        %v1354 = vunpack.c.l.b16 %v1306
        %v1355 = vunpack.c.l.b16 %v1307
        %v1356 = vunpack.c.l.b16 %v1308
        %v1357 = vunpack.c.l.b16 %v1309
        %v1358 = vunpack.c.l.b16 %v1310
        %v1359 = vunpack.c.l.b16 %v1311
        %v1360 = vunpack.c.l.b16 %v1312
        %v1361 = vunpack.c.l.b16 %v1313
        %v1362 = vunpack.c.l.b16 %v1314
        %v1363 = vunpack.c.l.b16 %v1315
        %v1364 = vunpack.c.l.b16 %v1316
        %v1365 = vunpack.c.l.b16 %v1317
        %v1366 = vunpack.c.l.b16 %v1318
        %v1367 = vunpack.c.l.b16 %v1319
        %v1368 = vunpack.c.l.b16 %v1320
        %v1369 = vunpack.c.l.b16 %v1321
        %v1370 = vunpack.c.l.b16 %v1322
        %v1371 = vunpack.c.l.b16 %v1323
        %v1372 = vunpack.c.l.b16 %v1324
        %v1373 = vunpack.c.l.b16 %v1325
        %v1374 = vunpack.c.l.b16 %v1326
        %v1375 = vunpack.c.l.b16 %v1327
        %v1376 = vunpack.c.l.b16 %v1328
        %v1377 = vpack.c.b16 %v1354, %v1353
        %v1378 = vpack.c.b16 %v1356, %v1355
        %v1379 = vpack.c.b16 %v1358, %v1357
        %v1380 = vpack.c.b16 %v1360, %v1359
        %v1381 = vpack.c.b16 %v1362, %v1361
        %v1382 = vpack.c.b16 %v1364, %v1363
        %v1383 = vpack.c.b16 %v1366, %v1365
        %v1384 = vpack.c.b16 %v1368, %v1367
        %v1385 = vpack.c.b16 %v1370, %v1369
        %v1386 = vpack.c.b16 %v1372, %v1371
        %v1387 = vpack.c.b16 %v1374, %v1373
        %v1388 = vpack.c.b16 %v1376, %v1375
        %v1402 = vsel %vm234, %v1297, 0
        %v1405 = vsel %vm234, %v1299, 0
        %v1408 = vsel %vm234, %v1301, 0
        %v1411 = vsel %vm234, %v1303, 0
        %1413 = vmatpush.bf16.msra.mxu0 %v1384
        %1414 = vmatpush.bf16.msra.mxu0 %v1383
        %1415 = vmatpush.bf16.msra.mxu0 %v1382
        %1416 = vmatpush.bf16.msra.mxu0 %v1381
        %1417 = vmatpush.bf16.msra.mxu0 %v1380
        %1418 = vmatpush.bf16.msra.mxu0 %v1379
        %1419 = vmatpush.bf16.msra.mxu0 %v1378
        %1420 = vmatpush.bf16.msra.mxu0 %v1377
        %1421 = vmatmul.bf16.gmra.mxu0 %v1296
        %v1422 = vpop.f32.mrf.mxu0
        %v1423 = vadd.f32 0.0, %v1422
        %v1424 = vpop.f32.mrf.mxu0
        %v1425 = vadd.f32 0.0, %v1424
        %1426 = vmatmul.bf16.gmra.mxu0 %v1298
        %v1427 = vpop.f32.mrf.mxu0
        %v1428 = vadd.f32 0.0, %v1427
        %v1429 = vpop.f32.mrf.mxu0
        %v1430 = vadd.f32 0.0, %v1429
        %1431 = vmatmul.bf16.gmra.mxu0 %v1300
        %v1432 = vpop.f32.mrf.mxu0
        %v1433 = vadd.f32 0.0, %v1432
        %v1434 = vpop.f32.mrf.mxu0
        %v1435 = vadd.f32 0.0, %v1434
        %1436 = vmatmul.bf16.gmra.mxu0 %v1302
        %v1437 = vpop.f32.mrf.mxu0
        %v1438 = vadd.f32 0.0, %v1437
        %v1439 = vpop.f32.mrf.mxu0
        %v1440 = vadd.f32 0.0, %v1439
        %1441 = vdwg.mxu0
        %1442 = vmatpush.bf16.msra.mxu0 0
        %1443 = vmatpush.bf16.msra.mxu0 0
        %1444 = vmatpush.bf16.msra.mxu0 0
        %1445 = vmatpush.bf16.msra.mxu0 0
        %1446 = vmatpush.bf16.msra.mxu0 %v1388
        %1447 = vmatpush.bf16.msra.mxu0 %v1387
        %1448 = vmatpush.bf16.msra.mxu0 %v1386
        %1449 = vmatpush.bf16.msra.mxu0 %v1385
        %1450 = vmatmul.bf16.gmra.mxu0 %v1402
        %v1451 = vpop.f32.mrf.mxu0
        %v1452 = vadd.f32 %v1423, %v1451
        %v1453 = vpop.f32.mrf.mxu0
        %v1454 = vadd.f32 %v1425, %v1453
        %1455 = vmatmul.bf16.gmra.mxu0 %v1405
        %v1456 = vpop.f32.mrf.mxu0
        %v1457 = vadd.f32 %v1428, %v1456
        %v1458 = vpop.f32.mrf.mxu0
        %v1459 = vadd.f32 %v1430, %v1458
        %1460 = vmatmul.bf16.gmra.mxu0 %v1408
        %v1461 = vpop.f32.mrf.mxu0
        %v1462 = vadd.f32 %v1433, %v1461
        %v1463 = vpop.f32.mrf.mxu0
        %v1464 = vadd.f32 %v1435, %v1463
        %1465 = vmatmul.bf16.gmra.mxu0 %v1411
        %v1466 = vpop.f32.mrf.mxu0
        %v1467 = vadd.f32 %v1438, %v1466
        %v1468 = vpop.f32.mrf.mxu0
        %v1469 = vadd.f32 %v1440, %v1468
        %1470 = vdwg.mxu0
        %v1495 = vunpack.c.l.b16 %v1208
        %v1496 = vunpack.c.l.b16 %v1209
        %v1497 = vunpack.c.l.b16 %v1210
        %v1498 = vunpack.c.l.b16 %v1211
        %v1499 = vunpack.c.l.b16 %v1212
        %v1500 = vunpack.c.l.b16 %v1213
        %v1501 = vunpack.c.l.b16 %v1214
        %v1502 = vunpack.c.l.b16 %v1215
        %v1503 = vunpack.c.l.b16 %v1216
        %v1504 = vunpack.c.l.b16 %v1217
        %v1505 = vunpack.c.l.b16 %v1218
        %v1506 = vunpack.c.l.b16 %v1219
        %v1507 = vunpack.c.l.b16 %v1220
        %v1508 = vunpack.c.l.b16 %v1221
        %v1509 = vunpack.c.l.b16 %v1222
        %v1510 = vunpack.c.l.b16 %v1223
        %v1511 = vunpack.c.l.b16 %v1224
        %v1512 = vunpack.c.l.b16 %v1225
        %v1513 = vunpack.c.l.b16 %v1226
        %v1514 = vunpack.c.l.b16 %v1227
        %v1515 = vunpack.c.l.b16 %v1228
        %v1516 = vunpack.c.l.b16 %v1229
        %v1517 = vunpack.c.l.b16 %v1230
        %v1518 = vunpack.c.l.b16 %v1231
        %v1519 = vpack.c.b16 %v1496, %v1495
        %v1520 = vpack.c.b16 %v1498, %v1497
        %v1521 = vpack.c.b16 %v1500, %v1499
        %v1522 = vpack.c.b16 %v1502, %v1501
        %v1523 = vpack.c.b16 %v1504, %v1503
        %v1524 = vpack.c.b16 %v1506, %v1505
        %v1525 = vpack.c.b16 %v1508, %v1507
        %v1526 = vpack.c.b16 %v1510, %v1509
        %v1527 = vpack.c.b16 %v1512, %v1511
        %v1528 = vpack.c.b16 %v1514, %v1513
        %v1529 = vpack.c.b16 %v1516, %v1515
        %v1530 = vpack.c.b16 %v1518, %v1517
        %v1544 = vsel %vm234, %v1201, 0
        %v1547 = vsel %vm234, %v1203, 0
        %v1550 = vsel %vm234, %v1205, 0
        %v1553 = vsel %vm234, %v1207, 0
        %1555 = vmatpush.bf16.msra.mxu0 %v1526
        %1556 = vmatpush.bf16.msra.mxu0 %v1525
        %1557 = vmatpush.bf16.msra.mxu0 %v1524
        %1558 = vmatpush.bf16.msra.mxu0 %v1523
        %1559 = vmatpush.bf16.msra.mxu0 %v1522
        %1560 = vmatpush.bf16.msra.mxu0 %v1521
        %1561 = vmatpush.bf16.msra.mxu0 %v1520
        %1562 = vmatpush.bf16.msra.mxu0 %v1519
        %1563 = vmatmul.bf16.gmra.mxu0 %v1200
        %v1564 = vpop.f32.mrf.mxu0
        %v1565 = vadd.f32 %v1452, %v1564
        %v1566 = vpop.f32.mrf.mxu0
        %v1567 = vadd.f32 %v1454, %v1566
        %1568 = vmatmul.bf16.gmra.mxu0 %v1202
        %v1569 = vpop.f32.mrf.mxu0
        %v1570 = vadd.f32 %v1457, %v1569
        %v1571 = vpop.f32.mrf.mxu0
        %v1572 = vadd.f32 %v1459, %v1571
        %1573 = vmatmul.bf16.gmra.mxu0 %v1204
        %v1574 = vpop.f32.mrf.mxu0
        %v1575 = vadd.f32 %v1462, %v1574
        %v1576 = vpop.f32.mrf.mxu0
        %v1577 = vadd.f32 %v1464, %v1576
        %1578 = vmatmul.bf16.gmra.mxu0 %v1206
        %v1579 = vpop.f32.mrf.mxu0
        %v1580 = vadd.f32 %v1467, %v1579
        %v1581 = vpop.f32.mrf.mxu0
        %v1582 = vadd.f32 %v1469, %v1581
        %1583 = vdwg.mxu0
        %1584 = vmatpush.bf16.msra.mxu0 0
        %1585 = vmatpush.bf16.msra.mxu0 0
        %1586 = vmatpush.bf16.msra.mxu0 0
        %1587 = vmatpush.bf16.msra.mxu0 0
        %1588 = vmatpush.bf16.msra.mxu0 %v1530
        %1589 = vmatpush.bf16.msra.mxu0 %v1529
        %1590 = vmatpush.bf16.msra.mxu0 %v1528
        %1591 = vmatpush.bf16.msra.mxu0 %v1527
        %1592 = vmatmul.bf16.gmra.mxu0 %v1544
        %v1593 = vpop.f32.mrf.mxu0
        %v1594 = vadd.f32 %v1565, %v1593
        %v1595 = vpop.f32.mrf.mxu0
        %v1596 = vadd.f32 %v1567, %v1595
        %1597 = vmatmul.bf16.gmra.mxu0 %v1547
        %v1598 = vpop.f32.mrf.mxu0
        %v1599 = vadd.f32 %v1570, %v1598
        %v1600 = vpop.f32.mrf.mxu0
        %v1601 = vadd.f32 %v1572, %v1600
        %1602 = vmatmul.bf16.gmra.mxu0 %v1550
        %v1603 = vpop.f32.mrf.mxu0
        %v1604 = vadd.f32 %v1575, %v1603
        %v1605 = vpop.f32.mrf.mxu0
        %v1606 = vadd.f32 %v1577, %v1605
        %1607 = vmatmul.bf16.gmra.mxu0 %v1553
        %v1608 = vpop.f32.mrf.mxu0
        %v1609 = vadd.f32 %v1580, %v1608
        %v1610 = vpop.f32.mrf.mxu0
        %v1611 = vadd.f32 %v1582, %v1610
        %1612 = vdwg.mxu0
        %v1613 = vld [vmem:[%s748] sm:$0xff]
        %v1614 = vld [vmem:[%s748 + $0x10] sm:$0xff]
        %v1615 = vld [vmem:[%s748 + $0x20] sm:$0xff]
        %v1616 = vld [vmem:[%s748 + $0x30] sm:$0xff]
        %v1617 = vld [vmem:[%s748 + $0x40] sm:$0xff]
        %v1618 = vld [vmem:[%s748 + $0x50] sm:$0xff]
        %v1619 = vld [vmem:[%s748 + $0x60] sm:$0xff]
        %v1620 = vld [vmem:[%s748 + $0x70] sm:$0xff]
        %v1621 = vld [vmem:[%s748 + $0x1] sm:$0xff]
        %v1622 = vld [vmem:[%s748 + $0x11] sm:$0xff]
        %v1623 = vld [vmem:[%s748 + $0x21] sm:$0xff]
        %v1624 = vld [vmem:[%s748 + $0x31] sm:$0xff]
        %v1625 = vld [vmem:[%s748 + $0x41] sm:$0xff]
        %v1626 = vld [vmem:[%s748 + $0x51] sm:$0xff]
        %v1627 = vld [vmem:[%s748 + $0x61] sm:$0xff]
        %v1628 = vld [vmem:[%s748 + $0x71] sm:$0xff]
        %v1629 = vld [vmem:[%s748 + $0x2] sm:$0xff]
        %v1630 = vld [vmem:[%s748 + $0x12] sm:$0xff]
        %v1631 = vld [vmem:[%s748 + $0x22] sm:$0xff]
        %v1632 = vld [vmem:[%s748 + $0x32] sm:$0xff]
        %v1633 = vld [vmem:[%s748 + $0x42] sm:$0xff]
        %v1634 = vld [vmem:[%s748 + $0x52] sm:$0xff]
        %v1635 = vld [vmem:[%s748 + $0x62] sm:$0xff]
        %v1636 = vld [vmem:[%s748 + $0x72] sm:$0xff]
        %1645 = vrot.lane.b32.xlu0 %v1621, 64
        %v1646 = vpop.permute.xlu0 %1645
        %1647 = vrot.lane.b32.xlu0 %v1622, 64
        %v1648 = vpop.permute.xlu0 %1647
        %1649 = vrot.lane.b32.xlu0 %v1623, 64
        %v1650 = vpop.permute.xlu0 %1649
        %1651 = vrot.lane.b32.xlu0 %v1624, 64
        %v1652 = vpop.permute.xlu0 %1651
        %1653 = vrot.lane.b32.xlu0 %v1625, 64
        %v1654 = vpop.permute.xlu0 %1653
        %1655 = vrot.lane.b32.xlu0 %v1626, 64
        %v1656 = vpop.permute.xlu0 %1655
        %1657 = vrot.lane.b32.xlu0 %v1627, 64
        %v1658 = vpop.permute.xlu0 %1657
        %1659 = vrot.lane.b32.xlu0 %v1628, 64
        %v1660 = vpop.permute.xlu0 %1659
        %v1669 = vsel %vm234, %v1613, %v1646
        %v1670 = vsel %vm234, %v1614, %v1648
        %v1671 = vsel %vm234, %v1615, %v1650
        %v1672 = vsel %vm234, %v1616, %v1652
        %v1673 = vsel %vm234, %v1617, %v1654
        %v1674 = vsel %vm234, %v1618, %v1656
        %v1675 = vsel %vm234, %v1619, %v1658
        %v1676 = vsel %vm234, %v1620, %v1660
        %v1677 = vpack.c.bf16 %v1670, %v1669
        %v1678 = vpack.c.bf16 %v1630, %v1629
        %v1679 = vpack.c.bf16 %v1672, %v1671
        %v1680 = vpack.c.bf16 %v1632, %v1631
        %v1681 = vpack.c.bf16 %v1674, %v1673
        %v1682 = vpack.c.bf16 %v1634, %v1633
        %v1683 = vpack.c.bf16 %v1676, %v1675
        %v1684 = vpack.c.bf16 %v1636, %v1635
        %s1685 = scalar_lea.vmem %s2, 192
        %v1686 = vld [vmem:[%s1685] sm:$0xf]
        %v1687 = vld [vmem:[%s1685 + $0x4] sm:$0xf]
        %v1688 = vld [vmem:[%s1685 + $0x8] sm:$0xf]
        %v1689 = vld [vmem:[%s1685 + $0xc] sm:$0xf]
        %v1690 = vld [vmem:[%s1685 + $0x10] sm:$0xf]
        %v1691 = vld [vmem:[%s1685 + $0x14] sm:$0xf]
        %v1692 = vld [vmem:[%s1685 + $0x18] sm:$0xf]
        %v1693 = vld [vmem:[%s1685 + $0x1c] sm:$0xf]
        %v1694 = vld [vmem:[%s1685 + $0x20] sm:$0xf]
        %v1695 = vld [vmem:[%s1685 + $0x24] sm:$0xf]
        %v1696 = vld [vmem:[%s1685 + $0x28] sm:$0xf]
        %v1697 = vld [vmem:[%s1685 + $0x2c] sm:$0xf]
        %v1698 = vld [vmem:[%s1685 + $0x30] sm:$0xf]
        %v1699 = vld [vmem:[%s1685 + $0x34] sm:$0xf]
        %v1700 = vld [vmem:[%s1685 + $0x38] sm:$0xf]
        %v1701 = vld [vmem:[%s1685 + $0x3c] sm:$0xf]
        %v1702 = vld [vmem:[%s1685 + $0x40] sm:$0xf]
        %v1703 = vld [vmem:[%s1685 + $0x44] sm:$0xf]
        %v1704 = vld [vmem:[%s1685 + $0x48] sm:$0xf]
        %v1705 = vld [vmem:[%s1685 + $0x4c] sm:$0xf]
        %v1706 = vld [vmem:[%s1685 + $0x50] sm:$0xf]
        %v1707 = vld [vmem:[%s1685 + $0x54] sm:$0xf]
        %v1708 = vld [vmem:[%s1685 + $0x58] sm:$0xf]
        %v1709 = vld [vmem:[%s1685 + $0x5c] sm:$0xf]
        %v1734 = vunpack.c.l.b16 %v1686
        %v1735 = vunpack.c.l.b16 %v1687
        %v1736 = vunpack.c.l.b16 %v1688
        %v1737 = vunpack.c.l.b16 %v1689
        %v1738 = vunpack.c.l.b16 %v1690
        %v1739 = vunpack.c.l.b16 %v1691
        %v1740 = vunpack.c.l.b16 %v1692
        %v1741 = vunpack.c.l.b16 %v1693
        %v1742 = vunpack.c.l.b16 %v1694
        %v1743 = vunpack.c.l.b16 %v1695
        %v1744 = vunpack.c.l.b16 %v1696
        %v1745 = vunpack.c.l.b16 %v1697
        %v1746 = vunpack.c.l.b16 %v1698
        %v1747 = vunpack.c.l.b16 %v1699
        %v1748 = vunpack.c.l.b16 %v1700
        %v1749 = vunpack.c.l.b16 %v1701
        %v1750 = vunpack.c.l.b16 %v1702
        %v1751 = vunpack.c.l.b16 %v1703
        %v1752 = vunpack.c.l.b16 %v1704
        %v1753 = vunpack.c.l.b16 %v1705
        %v1754 = vunpack.c.l.b16 %v1706
        %v1755 = vunpack.c.l.b16 %v1707
        %v1756 = vunpack.c.l.b16 %v1708
        %v1757 = vunpack.c.l.b16 %v1709
        %v1758 = vpack.c.b16 %v1735, %v1734
        %v1759 = vpack.c.b16 %v1737, %v1736
        %v1760 = vpack.c.b16 %v1739, %v1738
        %v1761 = vpack.c.b16 %v1741, %v1740
        %v1762 = vpack.c.b16 %v1743, %v1742
        %v1763 = vpack.c.b16 %v1745, %v1744
        %v1764 = vpack.c.b16 %v1747, %v1746
        %v1765 = vpack.c.b16 %v1749, %v1748
        %v1766 = vpack.c.b16 %v1751, %v1750
        %v1767 = vpack.c.b16 %v1753, %v1752
        %v1768 = vpack.c.b16 %v1755, %v1754
        %v1769 = vpack.c.b16 %v1757, %v1756
        %v1783 = vsel %vm234, %v1678, 0
        %v1786 = vsel %vm234, %v1680, 0
        %v1789 = vsel %vm234, %v1682, 0
        %v1792 = vsel %vm234, %v1684, 0
        %1794 = vmatpush.bf16.msra.mxu0 %v1765
        %1795 = vmatpush.bf16.msra.mxu0 %v1764
        %1796 = vmatpush.bf16.msra.mxu0 %v1763
        %1797 = vmatpush.bf16.msra.mxu0 %v1762
        %1798 = vmatpush.bf16.msra.mxu0 %v1761
        %1799 = vmatpush.bf16.msra.mxu0 %v1760
        %1800 = vmatpush.bf16.msra.mxu0 %v1759
        %1801 = vmatpush.bf16.msra.mxu0 %v1758
        %1802 = vmatmul.bf16.gmra.mxu0 %v1677
        %v1803 = vpop.f32.mrf.mxu0
        %v1804 = vadd.f32 0.0, %v1803
        %v1805 = vpop.f32.mrf.mxu0
        %v1806 = vadd.f32 0.0, %v1805
        %1807 = vmatmul.bf16.gmra.mxu0 %v1679
        %v1808 = vpop.f32.mrf.mxu0
        %v1809 = vadd.f32 0.0, %v1808
        %v1810 = vpop.f32.mrf.mxu0
        %v1811 = vadd.f32 0.0, %v1810
        %1812 = vmatmul.bf16.gmra.mxu0 %v1681
        %v1813 = vpop.f32.mrf.mxu0
        %v1814 = vadd.f32 0.0, %v1813
        %v1815 = vpop.f32.mrf.mxu0
        %v1816 = vadd.f32 0.0, %v1815
        %1817 = vmatmul.bf16.gmra.mxu0 %v1683
        %v1818 = vpop.f32.mrf.mxu0
        %v1819 = vadd.f32 0.0, %v1818
        %v1820 = vpop.f32.mrf.mxu0
        %v1821 = vadd.f32 0.0, %v1820
        %1822 = vdwg.mxu0
        %1823 = vmatpush.bf16.msra.mxu0 0
        %1824 = vmatpush.bf16.msra.mxu0 0
        %1825 = vmatpush.bf16.msra.mxu0 0
        %1826 = vmatpush.bf16.msra.mxu0 0
        %1827 = vmatpush.bf16.msra.mxu0 %v1769
        %1828 = vmatpush.bf16.msra.mxu0 %v1768
        %1829 = vmatpush.bf16.msra.mxu0 %v1767
        %1830 = vmatpush.bf16.msra.mxu0 %v1766
        %1831 = vmatmul.bf16.gmra.mxu0 %v1783
        %v1832 = vpop.f32.mrf.mxu0
        %v1833 = vadd.f32 %v1804, %v1832
        %v1834 = vpop.f32.mrf.mxu0
        %v1835 = vadd.f32 %v1806, %v1834
        %1836 = vmatmul.bf16.gmra.mxu0 %v1786
        %v1837 = vpop.f32.mrf.mxu0
        %v1838 = vadd.f32 %v1809, %v1837
        %v1839 = vpop.f32.mrf.mxu0
        %v1840 = vadd.f32 %v1811, %v1839
        %1841 = vmatmul.bf16.gmra.mxu0 %v1789
        %v1842 = vpop.f32.mrf.mxu0
        %v1843 = vadd.f32 %v1814, %v1842
        %v1844 = vpop.f32.mrf.mxu0
        %v1845 = vadd.f32 %v1816, %v1844
        %1846 = vmatmul.bf16.gmra.mxu0 %v1792
        %v1847 = vpop.f32.mrf.mxu0
        %v1848 = vadd.f32 %v1819, %v1847
        %v1849 = vpop.f32.mrf.mxu0
        %v1850 = vadd.f32 %v1821, %v1849
        %1851 = vdwg.mxu0
        %v1852 = vadd.f32 %v1594, %v1833
        %v1853 = vadd.f32 %v1596, %v1835
        %v1854 = vadd.f32 %v1599, %v1838
        %v1855 = vadd.f32 %v1601, %v1840
        %v1856 = vadd.f32 %v1604, %v1843
        %v1857 = vadd.f32 %v1606, %v1845
        %v1858 = vadd.f32 %v1609, %v1848
        %v1859 = vadd.f32 %v1611, %v1850
        %v1860 = vsel %vm234, %v1852, 0.0
        %v1861 = vsel %vm234, %v1853, 0.0
        %v1862 = vadd.f32 %v1860, %v1861
        %v1863 = vsel %vm234, %v1854, 0.0
        %v1864 = vadd.f32 %v1862, %v1863
        %v1865 = vsel %vm234, %v1855, 0.0
        %v1866 = vadd.f32 %v1864, %v1865
        %v1867 = vsel %vm234, %v1856, 0.0
        %v1868 = vadd.f32 %v1866, %v1867
        %v1869 = vsel %vm234, %v1857, 0.0
        %v1870 = vadd.f32 %v1868, %v1869
        %v1871 = vsel %vm234, %v1858, 0.0
        %v1872 = vadd.f32 %v1870, %v1871
        %v1873 = vsel %vm234, %v1859, 0.0
        %v1874 = vadd.f32 %v1872, %v1873
        %v1875 = vrot.slane %v1874, 4
        %v1876 = vadd.f32 %v1874, %v1875
        %v1877 = vrot.slane %v1876, 2
        %v1878 = vadd.f32 %v1876, %v1877
        %v1879 = vrot.slane %v1878, 1
        %v1880 = vadd.f32 %v1878, %v1879
        %v1881 = vmul.f32 %v1880, %v1023
        %v1882 = vsub.f32 %v1852, %v1881
        %v1883 = vsub.f32 %v1853, %v1881
        %v1884 = vsub.f32 %v1854, %v1881
        %v1885 = vsub.f32 %v1855, %v1881
        %v1886 = vsub.f32 %v1856, %v1881
        %v1887 = vsub.f32 %v1857, %v1881
        %v1888 = vsub.f32 %v1858, %v1881
        %v1889 = vsub.f32 %v1859, %v1881
        %v1890 = vmul.f32 %v1882, %v1882
        %v1891 = vmul.f32 %v1883, %v1883
        %v1892 = vmul.f32 %v1884, %v1884
        %v1893 = vmul.f32 %v1885, %v1885
        %v1894 = vmul.f32 %v1886, %v1886
        %v1895 = vmul.f32 %v1887, %v1887
        %v1896 = vmul.f32 %v1888, %v1888
        %v1897 = vmul.f32 %v1889, %v1889
        %v1898 = vsel %vm234, %v1890, 0.0
        %v1899 = vsel %vm234, %v1891, 0.0
        %v1900 = vadd.f32 %v1898, %v1899
        %v1901 = vsel %vm234, %v1892, 0.0
        %v1902 = vadd.f32 %v1900, %v1901
        %v1903 = vsel %vm234, %v1893, 0.0
        %v1904 = vadd.f32 %v1902, %v1903
        %v1905 = vsel %vm234, %v1894, 0.0
        %v1906 = vadd.f32 %v1904, %v1905
        %v1907 = vsel %vm234, %v1895, 0.0
        %v1908 = vadd.f32 %v1906, %v1907
        %v1909 = vsel %vm234, %v1896, 0.0
        %v1910 = vadd.f32 %v1908, %v1909
        %v1911 = vsel %vm234, %v1897, 0.0
        %v1912 = vadd.f32 %v1910, %v1911
        %v1913 = vrot.slane %v1912, 4
        %v1914 = vadd.f32 %v1912, %v1913
        %v1915 = vrot.slane %v1914, 2
        %v1916 = vadd.f32 %v1914, %v1915
        %v1917 = vrot.slane %v1916, 1
        %v1918 = vadd.f32 %v1916, %v1917
        %v1919 = vmul.f32 %v1918, %v1023
        %v1920 = vadd.f32 %v1919, 1e-05
        %v1921 = vrsqrt.pop %v1920
        %v1922 = vmul.f32 %v1921, %v1920
        %v1923 = vmul.f32 %v1922, %v1921
        %v1924 = vmul.f32 0.5, %v1923
        %v1925 = vsub.f32 1.5, %v1924
        %v1926 = vmul.f32 %v1921, %v1925
        %vm1927 = vweird.f32 %v1920
        %vm1928 = vweird.f32 %v1921
        %vm1929 = vmor %vm1927, %vm1928
        %v1930 = vsel %vm1929, %v1921, %v1926
        %v1931 = vmul.f32 %v1882, %v1930
        %v1932 = vmul.f32 %v1883, %v1930
        %v1933 = vmul.f32 %v1884, %v1930
        %v1934 = vmul.f32 %v1885, %v1930
        %v1935 = vmul.f32 %v1886, %v1930
        %v1936 = vmul.f32 %v1887, %v1930
        %v1937 = vmul.f32 %v1888, %v1930
        %v1938 = vmul.f32 %v1889, %v1930
        %v1939 = vmul.f32 %v1931, %v1083
        %v1940 = vmul.f32 %v1932, %v1083
        %v1941 = vmul.f32 %v1933, %v1083
        %v1942 = vmul.f32 %v1934, %v1083
        %v1943 = vmul.f32 %v1935, %v1083
        %v1944 = vmul.f32 %v1936, %v1083
        %v1945 = vmul.f32 %v1937, %v1083
        %v1946 = vmul.f32 %v1938, %v1083
        %v1947 = vadd.f32 %v1939, %v1094
        %v1948 = vadd.f32 %v1940, %v1094
        %v1949 = vadd.f32 %v1941, %v1094
        %v1950 = vadd.f32 %v1942, %v1094
        %v1951 = vadd.f32 %v1943, %v1094
        %v1952 = vadd.f32 %v1944, %v1094
        %v1953 = vadd.f32 %v1945, %v1094
        %v1954 = vadd.f32 %v1946, %v1094
        %v1955 = vadd.f32 %v1947, %v226
        %v1956 = vadd.f32 %v1948, %v227
        %v1957 = vadd.f32 %v1949, %v228
        %v1958 = vadd.f32 %v1950, %v229
        %v1959 = vadd.f32 %v1951, %v230
        %v1960 = vadd.f32 %v1952, %v231
        %v1961 = vadd.f32 %v1953, %v232
        %v1962 = vadd.f32 %v1954, %v233
        %1963 = vst.msk [vmem:[%s217] sm:$0xff] %vm234, %v1955
        %1964 = vst.msk [vmem:[%s217 + $0x8] sm:$0xff] %vm234, %v1956
        %1965 = vst.msk [vmem:[%s217 + $0x10] sm:$0xff] %vm234, %v1957
        %1966 = vst.msk [vmem:[%s217 + $0x18] sm:$0xff] %vm234, %v1958
        %1967 = vst.msk [vmem:[%s217 + $0x20] sm:$0xff] %vm234, %v1959
        %1968 = vst.msk [vmem:[%s217 + $0x28] sm:$0xff] %vm234, %v1960
        %1969 = vst.msk [vmem:[%s217 + $0x30] sm:$0xff] %vm234, %v1961
        %1970 = vst.msk [vmem:[%s217 + $0x38] sm:$0xff] %vm234, %v1962
        %s1971 = sand.u32 %s137, 1
        %s1972 = scalar_lea.sflag [#allocation4], %s1971
        %s1973 = sand.u32 %s137, 1
        %s1974 = smul.addr %s1973, 64
        %s1975 = scalar_lea.vmem [#allocation3], %s1974
        // Predicated region
        $region41: #{tpu_custom_call.1} parent=39 // pred_check
          %p1976 = pneg %p147
        $region42: #{tpu_custom_call.1} parent=39 // pred_check_branch
          %1978 = sbr.rel (%p1976) target = $region44
        $region43: #{tpu_custom_call.1} parent=39 // pred_region
          %1980 = vsyncadd %s1972, 0
          %s1981 = smul.addr %s19, 8
          %s1982 = smul.addr %s1981, 8
          %s1983 = scalar_lea.hbm %s5, %s1982
          %s1984 = sshll.u32 %s1975, 4
          %s1985 = int_to_ptr.vmem [resolvable:$true] %s1984
          %s1986 = sshll.u32 %s1983, 4
          %s1987 = int_to_ptr.hbm [resolvable:$true] %s1986
          %1992 = dma.vmem_to_hbm [thread:$0]  %s1985, 1024, %s1987, %s1972, 128, 128, 8
        $region44: #{tpu_custom_call.1} parent=39 // pred_fallthru
          _
      $region40: #{tpu_custom_call.1} parent=5 // pred_fallthru
        _
      %p1993 = scmp.le.s32.totalorder 2, %s14
      // Predicated region
      $region45: #{tpu_custom_call.1} parent=5 // pred_check
        %p1994 = pneg %p1993
      $region46: #{tpu_custom_call.1} parent=5 // pred_check_branch
        %1996 = sbr.rel (%p1994) target = $region48
      $region47: #{tpu_custom_call.1} parent=5 // pred_region
        %s1997 = ssub.s32 %s14, 2
        // Predicated region
        $region49: #{tpu_custom_call.1} parent=47 // pred_check
          %p1998 = pneg %p153
        $region50: #{tpu_custom_call.1} parent=47 // pred_check_branch
          %2000 = sbr.rel (%p1998) target = $region52
        $region51: #{tpu_custom_call.1} parent=47 // pred_region
          %s2001 = sand.u32 %s138, 1
          %s2002 = scalar_lea.sflag [#allocation4], %s2001
          %s2003 = sand.u32 %s138, 1
          %s2004 = smul.addr %s2003, 64
          %s2005 = scalar_lea.vmem [#allocation3], %s2004
          %2007 = dma.done %s2002, 1024
        $region52: #{tpu_custom_call.1} parent=47 // pred_fallthru
          _
      $region48: #{tpu_custom_call.1} parent=5 // pred_fallthru
        _
    $region6: #{tpu_custom_call.1} parent=1 // loop_footer
      %s18 = sadd.s32 1, %s14
    $region7: #{tpu_custom_call.1} parent=1 // loop_footer_branch
      %13 = sbr.rel target = $region3
    $region8: #{tpu_custom_call.1} parent=1 // loop_exit
      _
    %2008 = vsyncpa [#allocation4], 1
    %s2009 = scalar_lea.sflag [#allocation4], 1
    %2010 = vsyncpa %s2009, 1

</llo_original>
